<compile_context>
chip_gen: v6e
topology: v6e:2x2x1
jax: 0.10.0
libtpu: 0.0.40
codegen_flags: <defaults>
</compile_context>

<pallas_src>
import math
from functools import partial

import jax
import jax.numpy as jnp
from jax.experimental import pallas as pl
from jax.experimental.pallas import tpu as pltpu

_BN_EPS = 1e-5
_VMEM_LIMIT = 32 * 1024 * 1024  # safe scoped-VMEM cap on v5e / v6e / v7x


def _round_up(x, m):
    return (x + m - 1) // m * m


# ----------------------------------------------------------------------------
# Tiling helpers
# ----------------------------------------------------------------------------

def _pick_mn_tiles(M, N, tm_max=256, tn_max=256):
    """Row/col tiles sized to avoid padding for ResNet50's M/N values."""
    tm = _round_up(M, 8) if M < tm_max else tm_max
    Mp = _round_up(M, tm)
    # N that is not a multiple of 128 (64, num_class) -> full-dim block, no pad.
    tn = min(tn_max, N) if N % 128 == 0 else N
    return Mp, tm, tn


def _pick_k_tiling(K, single_max=1024):
    """Pad K to 128; single k-step when small, else a tk that divides K."""
    if K <= single_max:
        Kp = _round_up(K, 128)
        return Kp, Kp
    for tk in (512, 384, 256, 128):
        if K % tk == 0:
            return K, tk
    return _round_up(K, 128), 128


def _ew_tile(M, C, tm_max=512):
    # 512-row tiles reach ~85% of the HBM roofline; cap so each f32 block stays
    # ~4 MB (inputs + output, double-buffered, fit v7x's scoped VMEM).
    cap = max(8, ((4 << 20) // (C * 4)) // 8 * 8)
    return min(tm_max, cap, _round_up(M, 8))


# ----------------------------------------------------------------------------
# Pallas kernels
# ----------------------------------------------------------------------------

def _matmul_stats_kernel(a_ref, b_ref, o_ref, sum_ref, sq_ref, acc_ref):
    """C = A @ B (bf16 x bf16, f32 acc).  On the last K step also emits the
    per-row-block per-channel sum and sum-of-squares of C (for BatchNorm)."""
    @pl.when(pl.program_id(2) == 0)
    def _():
        acc_ref[...] = jnp.zeros_like(acc_ref)

    acc_ref[...] += jnp.dot(a_ref[...], b_ref[...],
                            preferred_element_type=jnp.float32)

    @pl.when(pl.program_id(2) == pl.num_programs(2) - 1)
    def _():
        y = acc_ref[...]
        o_ref[...] = y.astype(o_ref.dtype)
        sum_ref[...] = jnp.sum(y, axis=0)[None, None, :]
        sq_ref[...] = jnp.sum(y * y, axis=0)[None, None, :]


def _matmul_bias_kernel(a_ref, b_ref, bias_ref, o_ref, acc_ref):
    @pl.when(pl.program_id(2) == 0)
    def _():
        acc_ref[...] = jnp.zeros_like(acc_ref)

    acc_ref[...] += jnp.dot(a_ref[...], b_ref[...],
                            preferred_element_type=jnp.float32)

    @pl.when(pl.program_id(2) == pl.num_programs(2) - 1)
    def _():
        o_ref[...] = (acc_ref[...] + bias_ref[...]).astype(o_ref.dtype)


def _affine_kernel(x_ref, s_ref, b_ref, o_ref):
    o_ref[...] = x_ref[...] * s_ref[...] + b_ref[...]


def _affine_relu_kernel(x_ref, s_ref, b_ref, o_ref):
    o_ref[...] = jnp.maximum(x_ref[...] * s_ref[...] + b_ref[...], 0.0)


def _affine_add_relu_kernel(x_ref, r_ref, s_ref, b_ref, o_ref):
    o_ref[...] = jnp.maximum(
        x_ref[...] * s_ref[...] + b_ref[...] + r_ref[...], 0.0)


def _maxpool9_kernel(s0, s1, s2, s3, s4, s5, s6, s7, s8, o_ref):
    m = jnp.maximum(s0[...], s1[...])
    m = jnp.maximum(m, s2[...])
    m = jnp.maximum(m, s3[...])
    m = jnp.maximum(m, s4[...])
    m = jnp.maximum(m, s5[...])
    m = jnp.maximum(m, s6[...])
    m = jnp.maximum(m, s7[...])
    m = jnp.maximum(m, s8[...])
    o_ref[...] = m


def _gap_kernel(x_ref, o_ref):
    o_ref[...] = jnp.mean(x_ref[...], axis=1, keepdims=True)


def _matmul_compiler_params():
    return pltpu.CompilerParams(
        dimension_semantics=("parallel", "parallel", "arbitrary"),
        vmem_limit_bytes=_VMEM_LIMIT)


def _ew_compiler_params():
    return pltpu.CompilerParams(
        dimension_semantics=("parallel",),
        vmem_limit_bytes=_VMEM_LIMIT)


# ----------------------------------------------------------------------------
# Pallas wrappers
# ----------------------------------------------------------------------------

def pallas_conv_matmul(a_bf16, w_bf16):
    """y = A @ W (bias-free conv matmul) with fused per-channel (sum, sumsq)."""
    M, K = a_bf16.shape
    _, N = w_bf16.shape
    Mp, tm, tn = _pick_mn_tiles(M, N)
    Kp, tk = _pick_k_tiling(K)
    a_p = a_bf16
    if (Mp, Kp) != (M, K):
        a_p = jnp.pad(a_bf16, ((0, Mp - M), (0, Kp - K)))
    w_p = w_bf16
    if Kp != K:
        w_p = jnp.pad(w_bf16, ((0, Kp - K), (0, 0)))
    nm = Mp // tm
    out, s, q = pl.pallas_call(
        _matmul_stats_kernel,
        out_shape=(jax.ShapeDtypeStruct((Mp, N), jnp.float32),
                   jax.ShapeDtypeStruct((nm, 1, N), jnp.float32),
                   jax.ShapeDtypeStruct((nm, 1, N), jnp.float32)),
        grid_spec=pltpu.PrefetchScalarGridSpec(
            num_scalar_prefetch=0,
            grid=(nm, N // tn, Kp // tk),
            in_specs=[pl.BlockSpec((tm, tk), lambda i, j, k: (i, k)),
                      pl.BlockSpec((tk, tn), lambda i, j, k: (k, j))],
            out_specs=(pl.BlockSpec((tm, tn), lambda i, j, k: (i, j)),
                       pl.BlockSpec((1, 1, tn), lambda i, j, k: (i, 0, j)),
                       pl.BlockSpec((1, 1, tn), lambda i, j, k: (i, 0, j))),
            scratch_shapes=[pltpu.VMEM((tm, tn), jnp.float32)],
        ),
        compiler_params=_matmul_compiler_params(),
    )(a_p, w_p)
    if Mp != M:
        out = out[:M]
    # Padded A rows are zero (no bias), so they contribute nothing to the sums.
    colsum = jnp.sum(s[:, 0, :], axis=0)
    colsq = jnp.sum(q[:, 0, :], axis=0)
    return out, colsum, colsq


def pallas_matmul_bias(a_bf16, w_bf16, bias_f32):
    """C = A @ W + bias (head Linear)."""
    M, K = a_bf16.shape
    _, N = w_bf16.shape
    Mp, tm, tn = _pick_mn_tiles(M, N)
    Kp, tk = _pick_k_tiling(K)
    a_p = a_bf16
    if (Mp, Kp) != (M, K):
        a_p = jnp.pad(a_bf16, ((0, Mp - M), (0, Kp - K)))
    w_p = w_bf16
    if Kp != K:
        w_p = jnp.pad(w_bf16, ((0, Kp - K), (0, 0)))
    out = pl.pallas_call(
        _matmul_bias_kernel,
        out_shape=jax.ShapeDtypeStruct((Mp, N), jnp.float32),
        grid_spec=pltpu.PrefetchScalarGridSpec(
            num_scalar_prefetch=0,
            grid=(Mp // tm, N // tn, Kp // tk),
            in_specs=[pl.BlockSpec((tm, tk), lambda i, j, k: (i, k)),
                      pl.BlockSpec((tk, tn), lambda i, j, k: (k, j)),
                      pl.BlockSpec((1, tn), lambda i, j, k: (0, j))],
            out_specs=pl.BlockSpec((tm, tn), lambda i, j, k: (i, j)),
            scratch_shapes=[pltpu.VMEM((tm, tn), jnp.float32)],
        ),
        compiler_params=_matmul_compiler_params(),
    )(a_p, w_p, bias_f32)
    if Mp != M:
        out = out[:M]
    return out


def bn_scale_shift(x2d, scale, shift, relu):
    M, C = x2d.shape
    tm = _ew_tile(M, C)
    Mp = _round_up(M, tm)
    x_p = x2d if Mp == M else jnp.pad(x2d, ((0, Mp - M), (0, 0)))
    kernel = _affine_relu_kernel if relu else _affine_kernel
    out = pl.pallas_call(
        kernel,
        out_shape=jax.ShapeDtypeStruct((Mp, C), jnp.float32),
        grid_spec=pltpu.PrefetchScalarGridSpec(
            num_scalar_prefetch=0,
            grid=(Mp // tm,),
            in_specs=[pl.BlockSpec((tm, C), lambda i: (i, 0)),
                      pl.BlockSpec((1, C), lambda i: (0, 0)),
                      pl.BlockSpec((1, C), lambda i: (0, 0))],
            out_specs=pl.BlockSpec((tm, C), lambda i: (i, 0)),
        ),
        compiler_params=_ew_compiler_params(),
    )(x_p, scale[None, :], shift[None, :])
    return out if Mp == M else out[:M]


def bn_scale_shift_add_relu(x2d, r2d, scale, shift):
    M, C = x2d.shape
    tm = _ew_tile(M, C)
    Mp = _round_up(M, tm)
    x_p = x2d if Mp == M else jnp.pad(x2d, ((0, Mp - M), (0, 0)))
    r_p = r2d if Mp == M else jnp.pad(r2d, ((0, Mp - M), (0, 0)))
    out = pl.pallas_call(
        _affine_add_relu_kernel,
        out_shape=jax.ShapeDtypeStruct((Mp, C), jnp.float32),
        grid_spec=pltpu.PrefetchScalarGridSpec(
            num_scalar_prefetch=0,
            grid=(Mp // tm,),
            in_specs=[pl.BlockSpec((tm, C), lambda i: (i, 0)),
                      pl.BlockSpec((tm, C), lambda i: (i, 0)),
                      pl.BlockSpec((1, C), lambda i: (0, 0)),
                      pl.BlockSpec((1, C), lambda i: (0, 0))],
            out_specs=pl.BlockSpec((tm, C), lambda i: (i, 0)),
        ),
        compiler_params=_ew_compiler_params(),
    )(x_p, r_p, scale[None, :], shift[None, :])
    return out if Mp == M else out[:M]


# ----------------------------------------------------------------------------
# JAX glue: window slicing, conv / BN / pool / head ops
# ----------------------------------------------------------------------------

def _window_slices(x, k, stride, pad, pad_value):
    """x: NHWC -> list of k*k shifted strided slices (each (N, Ho, Wo, C))."""
    if pad > 0:
        x = jnp.pad(x, ((0, 0), (pad, pad), (pad, pad), (0, 0)),
                    constant_values=pad_value)
    _, H, W, _ = x.shape
    Ho = (H - k) // stride + 1
    Wo = (W - k) // stride + 1
    slices = []
    for dy in range(k):
        for dx in range(k):
            slices.append(
                x[:, dy:dy + stride * (Ho - 1) + 1:stride,
                  dx:dx + stride * (Wo - 1) + 1:stride, :])
    return slices, Ho, Wo


@partial(jax.jit, static_argnames=("k", "stride", "pad"))
def conv2d(x, w_bf16, *, k, stride, pad):
    """x: NHWC f32.  Returns (y NHWC f32, per-channel sum, per-channel sumsq)."""
    # TODO(synk): implicit im2col (KK grid axis reading shifted NHWC tiles inside
    # the matmul) would remove the materialized patch matrix; for now patches are
    # built and concatenated in bf16 to halve the HBM traffic of this step.
    N = x.shape[0]
    xb = x.astype(jnp.bfloat16)
    if k == 1:
        if stride > 1:
            xb = xb[:, ::stride, ::stride, :]
        _, Ho, Wo, C = xb.shape
        patches = xb.reshape(N * Ho * Wo, C)
    else:
        slices, Ho, Wo = _window_slices(xb, k, stride, pad, 0.0)
        patches = jnp.concatenate(slices, axis=-1).reshape(N * Ho * Wo, -1)
    y, colsum, colsq = pallas_conv_matmul(patches, w_bf16)
    cout = w_bf16.shape[1]
    return y.reshape(N, Ho, Wo, cout), colsum, colsq


def _bn_scale_shift_params(colsum, colsq, count):
    mean = colsum / count
    var = jnp.maximum(colsq / count - mean * mean, 0.0)   # clamp cancellation
    scale = jax.lax.rsqrt(var + _BN_EPS)                   # gamma = 1
    shift = -mean * scale                                  # beta  = 0
    return scale, shift


@partial(jax.jit, static_argnames=("relu",))
def batchnorm(x, colsum, colsq, relu):
    """Training-mode BatchNorm2d using stats fused into the producing matmul."""
    N, H, W, C = x.shape
    scale, shift = _bn_scale_shift_params(colsum, colsq, float(N * H * W))
    y2 = bn_scale_shift(x.reshape(-1, C), scale, shift, relu=relu)
    return y2.reshape(N, H, W, C)


@jax.jit
def batchnorm_add_relu(x, colsum, colsq, residual):
    """BN(x) + residual, then ReLU — fused in one Pallas elementwise kernel."""
    N, H, W, C = x.shape
    scale, shift = _bn_scale_shift_params(colsum, colsq, float(N * H * W))
    y2 = bn_scale_shift_add_relu(x.reshape(-1, C), residual.reshape(-1, C),
                                 scale, shift)
    return y2.reshape(N, H, W, C)


@jax.jit
def maxpool_3x3_s2(x):
    slices, Ho, Wo = _window_slices(x, 3, 2, 1, float("-inf"))
    N, C = x.shape[0], x.shape[-1]
    M = N * Ho * Wo
    flat = [s.reshape(M, C) for s in slices]
    tm = _ew_tile(M, C)
    Mp = _round_up(M, tm)
    if Mp != M:
        flat = [jnp.pad(f, ((0, Mp - M), (0, 0))) for f in flat]
    out = pl.pallas_call(
        _maxpool9_kernel,
        out_shape=jax.ShapeDtypeStruct((Mp, C), jnp.float32),
        grid_spec=pltpu.PrefetchScalarGridSpec(
            num_scalar_prefetch=0,
            grid=(Mp // tm,),
            in_specs=[pl.BlockSpec((tm, C), lambda i: (i, 0))] * 9,
            out_specs=pl.BlockSpec((tm, C), lambda i: (i, 0)),
        ),
        compiler_params=_ew_compiler_params(),
    )(*flat)
    if Mp != M:
        out = out[:M]
    return out.reshape(N, Ho, Wo, C)


@jax.jit
def global_avg_pool(x):
    """(N, H, W, C) -> (N, C) mean over spatial positions."""
    N, H, W, C = x.shape
    x3 = x.reshape(N, H * W, C)
    out = pl.pallas_call(
        _gap_kernel,
        out_shape=jax.ShapeDtypeStruct((N, 1, C), jnp.float32),
        grid_spec=pltpu.PrefetchScalarGridSpec(
            num_scalar_prefetch=0,
            grid=(N,),
            in_specs=[pl.BlockSpec((1, H * W, C), lambda n: (n, 0, 0))],
            out_specs=pl.BlockSpec((1, 1, C), lambda n: (n, 0, 0)),
        ),
        compiler_params=_ew_compiler_params(),
    )(x3)
    return out[:, 0, :]


@jax.jit
def head_linear(feat, w_bf16, bias_f32):
    return pallas_matmul_bias(feat.astype(jnp.bfloat16), w_bf16, bias_f32)


# ----------------------------------------------------------------------------
# Parameter construction (matches the module's reset_parameters())
# ----------------------------------------------------------------------------

class _KeyGen:
    def __init__(self, seed):
        self._key = jax.random.PRNGKey(seed)
        self._i = 0

    def __call__(self):
        self._i += 1
        return jax.random.fold_in(self._key, self._i)


def make_conv(kg, cin, cout, k, stride, pad):
    # xavier_uniform: bound = sqrt(6 / (fan_in + fan_out)), fans = c * k * k
    fan_in, fan_out = cin * k * k, cout * k * k
    bound = math.sqrt(6.0 / (fan_in + fan_out))
    w = jax.random.uniform(kg(), (k, k, cin, cout), jnp.float32, -bound, bound)
    # stored as bf16 for the MXU (accumulation stays f32 inside the kernel)
    return {"w": w.reshape(k * k * cin, cout).astype(jnp.bfloat16),
            "k": k, "stride": stride, "pad": pad}


def make_resnet50_params(num_class, seed=0):
    kg = _KeyGen(seed)
    params = {"conv1": make_conv(kg, 3, 64, 7, 2, 3)}
    layer_cfg = [(64, 3, 1), (128, 4, 2), (256, 6, 2), (512, 3, 2)]
    in_c = 64
    layers = []
    for width, blocks, stride in layer_cfg:
        layer = []
        for b in range(blocks):
            s = stride if b == 0 else 1
            blk = {
                "conv1": make_conv(kg, in_c, width, 1, 1, 0),
                "conv2": make_conv(kg, width, width, 3, s, 1),
                "conv3": make_conv(kg, width, width * 4, 1, 1, 0),
            }
            if b == 0:  # downsample branch (1x1 conv + BN)
                blk["down"] = make_conv(kg, in_c, width * 4, 1, s, 0)
            layer.append(blk)
            in_c = width * 4
        layers.append(layer)
    params["layers"] = layers
    # head: nn.Linear(2048, num_class); weight ~ N(0,1), bias = 0
    params["head_w"] = jax.random.normal(
        kg(), (2048, num_class), jnp.float32).astype(jnp.bfloat16)
    params["head_b"] = jnp.zeros((1, num_class), jnp.float32)
    return params


# ----------------------------------------------------------------------------
# Forward pass
# ----------------------------------------------------------------------------

def _apply_conv(x, conv):
    return conv2d(x, conv["w"], k=conv["k"], stride=conv["stride"],
                  pad=conv["pad"])


def bottleneck(x, blk):
    out, s, q = _apply_conv(x, blk["conv1"])
    out = batchnorm(out, s, q, relu=True)
    out, s, q = _apply_conv(out, blk["conv2"])
    out = batchnorm(out, s, q, relu=True)
    out, s, q = _apply_conv(out, blk["conv3"])
    if "down" in blk:
        idn, si, qi = _apply_conv(x, blk["down"])
        identity = batchnorm(idn, si, qi, relu=False)
    else:
        identity = x
    # bn3(out) + identity, then ReLU (single fused Pallas kernel)
    return batchnorm_add_relu(out, s, q, identity)


def resnet50_forward(params, x_nchw):
    # layout: NCHW input (PyTorch) -> NHWC internally
    x = jnp.transpose(x_nchw, (0, 2, 3, 1)).astype(jnp.float32)
    x, s, q = _apply_conv(x, params["conv1"])
    x = batchnorm(x, s, q, relu=True)
    x = maxpool_3x3_s2(x)
    for layer in params["layers"]:
        for blk in layer:
            x = bottleneck(x, blk)
    feat = global_avg_pool(x)          # (N, 2048)
    # TODO(synk): the reference forward feeds (N,2048,1,1) straight into nn.Linear
    # (which errors in PyTorch); we apply the intended flatten before the head.
    return head_linear(feat, params["head_w"], params["head_b"])


if __name__ == "__main__":
    num_class = 10
    params = make_resnet50_params(num_class, seed=0)
    x = jax.random.normal(jax.random.PRNGKey(0), (2, 3, 32, 32), jnp.float32)
    out = resnet50_forward(params, x)
    out = jax.block_until_ready(out)
    assert out.shape == (2, num_class), out.shape
    assert bool(jnp.all(jnp.isfinite(out)))
    print("KERNEL_OK")
</pallas_src>

<mosaic_0001>
module attributes {stable_mosaic.version = 11 : i64} {
  func.func @_matmul_stats_kernel(%arg0: i32, %arg1: i32, %arg2: i32, %arg3: memref<256x256xbf16, #tpu.memory_space<vmem>>, %arg4: memref<256x64xbf16, #tpu.memory_space<vmem>>, %arg5: memref<256x64xf32, #tpu.memory_space<vmem>>, %arg6: memref<1x1x64xf32, #tpu.memory_space<vmem>>, %arg7: memref<1x1x64xf32, #tpu.memory_space<vmem>>, %arg8: memref<256x64xf32, #tpu.memory_space<vmem>>) attributes {dimension_semantics = [#tpu.dimension_semantics<parallel>, #tpu.dimension_semantics<parallel>, #tpu.dimension_semantics<arbitrary>], iteration_bounds = array<i64: 2, 1, 1>, scalar_prefetch = 0 : i64, scratch_operands = 1 : i64, tpu.core_type = #tpu.core_type<tc>, window_params = [{transform_indices = @transform_0, window_bounds = array<i64: 256, 256>}, {transform_indices = @transform_1, window_bounds = array<i64: 256, 64>}, {transform_indices = @transform_2, window_bounds = array<i64: 256, 64>}, {transform_indices = @transform_3, window_bounds = array<i64: 1, 1, 64>}, {transform_indices = @transform_4, window_bounds = array<i64: 1, 1, 64>}]} {
    %c0_i32 = arith.constant 0 : i32
    %0 = arith.cmpi eq, %arg2, %c0_i32 : i32
    %1 = arith.extui %0 : i1 to i32
    %c0_i32_0 = arith.constant 0 : i32
    %2 = arith.cmpi ne, %1, %c0_i32_0 : i32
    scf.if %2 {
      %cst_10 = arith.constant 0.000000e+00 : f32
      %12 = vector.broadcast %cst_10 : f32 to vector<256x64xf32>
      %c0_11 = arith.constant 0 : index
      %c0_12 = arith.constant 0 : index
      %13 = vector.load %arg8[%c0_11, %c0_12] : memref<256x64xf32, #tpu.memory_space<vmem>>, vector<256x64xf32>
      tpu.vector_store %arg8[%c0_11, %c0_12], %12 {strides = array<i32>} : memref<256x64xf32, #tpu.memory_space<vmem>>, vector<256x64xf32>,
    } else {
    }
    %c0 = arith.constant 0 : index
    %c0_1 = arith.constant 0 : index
    %3 = vector.load %arg8[%c0, %c0_1] : memref<256x64xf32, #tpu.memory_space<vmem>>, vector<256x64xf32>
    %c0_2 = arith.constant 0 : index
    %c0_3 = arith.constant 0 : index
    %4 = vector.load %arg3[%c0_2, %c0_3] : memref<256x256xbf16, #tpu.memory_space<vmem>>, vector<256x256xbf16>
    %c0_4 = arith.constant 0 : index
    %c0_5 = arith.constant 0 : index
    %5 = vector.load %arg4[%c0_4, %c0_5] : memref<256x64xbf16, #tpu.memory_space<vmem>>, vector<256x64xbf16>
    %cst = arith.constant dense<0.000000e+00> : vector<256x64xf32>
    %6 = tpu.matmul %4, %5, %cst {dimension_numbers = #tpu.dot_dimension_numbers<[1], [0], [0], [1], [0, 0, 1, 1], [], []>} : vector<256x256xbf16>, vector<256x64xbf16>, vector<256x64xf32> -> vector<256x64xf32>
    %7 = arith.addf %3, %6 : vector<256x64xf32>
    %c0_6 = arith.constant 0 : index
    %c0_7 = arith.constant 0 : index
    %8 = vector.load %arg8[%c0_6, %c0_7] : memref<256x64xf32, #tpu.memory_space<vmem>>, vector<256x64xf32>
    tpu.vector_store %arg8[%c0_6, %c0_7], %7 {strides = array<i32>} : memref<256x64xf32, #tpu.memory_space<vmem>>, vector<256x64xf32>,
    %c0_i32_8 = arith.constant 0 : i32
    %9 = arith.cmpi eq, %arg2, %c0_i32_8 : i32
    %10 = arith.extui %9 : i1 to i32
    %c0_i32_9 = arith.constant 0 : i32
    %11 = arith.cmpi ne, %10, %c0_i32_9 : i32
    scf.if %11 {
      %c0_10 = arith.constant 0 : index
      %c0_11 = arith.constant 0 : index
      %12 = vector.load %arg8[%c0_10, %c0_11] : memref<256x64xf32, #tpu.memory_space<vmem>>, vector<256x64xf32>
      %c0_12 = arith.constant 0 : index
      %c0_13 = arith.constant 0 : index
      %13 = vector.load %arg5[%c0_12, %c0_13] : memref<256x64xf32, #tpu.memory_space<vmem>>, vector<256x64xf32>
      tpu.vector_store %arg5[%c0_12, %c0_13], %12 {strides = array<i32>} : memref<256x64xf32, #tpu.memory_space<vmem>>, vector<256x64xf32>,
      %cst_14 = arith.constant dense<0.000000e+00> : vector<64xf32>
      %14 = vector.multi_reduction <add>, %12, %cst_14 [0] : vector<256x64xf32> to vector<64xf32>
      %15 = vector.shape_cast %14 : vector<64xf32> to vector<1x1x64xf32>
      %c0_15 = arith.constant 0 : index
      %c0_16 = arith.constant 0 : index
      %c0_17 = arith.constant 0 : index
      %16 = vector.load %arg6[%c0_15, %c0_16, %c0_17] : memref<1x1x64xf32, #tpu.memory_space<vmem>>, vector<1x1x64xf32>
      tpu.vector_store %arg6[%c0_15, %c0_16, %c0_17], %15 {strides = array<i32>} : memref<1x1x64xf32, #tpu.memory_space<vmem>>, vector<1x1x64xf32>,
      %17 = arith.mulf %12, %12 : vector<256x64xf32>
      %cst_18 = arith.constant dense<0.000000e+00> : vector<64xf32>
      %18 = vector.multi_reduction <add>, %17, %cst_18 [0] : vector<256x64xf32> to vector<64xf32>
      %19 = vector.shape_cast %18 : vector<64xf32> to vector<1x1x64xf32>
      %c0_19 = arith.constant 0 : index
      %c0_20 = arith.constant 0 : index
      %c0_21 = arith.constant 0 : index
      %20 = vector.load %arg7[%c0_19, %c0_20, %c0_21] : memref<1x1x64xf32, #tpu.memory_space<vmem>>, vector<1x1x64xf32>
      tpu.vector_store %arg7[%c0_19, %c0_20, %c0_21], %19 {strides = array<i32>} : memref<1x1x64xf32, #tpu.memory_space<vmem>>, vector<1x1x64xf32>,
    } else {
    }
    return
  }
  func.func @transform_0(%arg0: i32, %arg1: i32, %arg2: i32) -> (i32, i32) {
    %c0_i32 = arith.constant 0 : i32
    return %arg0, %arg2 : i32, i32
  }
  func.func @transform_1(%arg0: i32, %arg1: i32, %arg2: i32) -> (i32, i32) {
    %c0_i32 = arith.constant 0 : i32
    return %arg2, %arg1 : i32, i32
  }
  func.func @transform_2(%arg0: i32, %arg1: i32, %arg2: i32) -> (i32, i32) {
    %c0_i32 = arith.constant 0 : i32
    return %arg0, %arg1 : i32, i32
  }
  func.func @transform_3(%arg0: i32, %arg1: i32, %arg2: i32) -> (i32, i32, i32) {
    %c0_i32 = arith.constant 0 : i32
    %c0_i32_0 = arith.constant 0 : i32
    return %arg0, %c0_i32, %arg1 : i32, i32, i32
  }
  func.func @transform_4(%arg0: i32, %arg1: i32, %arg2: i32) -> (i32, i32, i32) {
    %c0_i32 = arith.constant 0 : i32
    %c0_i32_0 = arith.constant 0 : i32
    return %arg0, %c0_i32, %arg1 : i32, i32, i32
  }
}

</mosaic_0001>

<llo_original>
// kernel: conv2d.1
$region0: #{conv2d.1}
  #allocation0 [shape = 'u32[]', space=smem, size = 0x4, offset = 0x4, fixed_abs, tag = 'smem constant byte address 0x4 - core index']
  #allocation1 [shape = 'u32[144,128]{1,0:T(1,128)}', space=vmem, size = 0x12000, scoped, tag = 'internal scratch']
  #allocation2 [shape = 'f32[256,64]{1,0:T(8,128)}', space=vmem, size = 0x20000, scoped, tag = 'scratch operand']
  %s0 = inlined_call_operand.vmem [shape: bf16[512,256], index: 0, kind: input, shape index: {}]
  %s1 = inlined_call_operand.vmem [shape: bf16[256,64], index: 1, kind: input, shape index: {}]
  %s2 = inlined_call_operand.hbm [shape: f32[512,64], index: 2, kind: output, shape index: {0}]
  %s3 = inlined_call_operand.vmem [shape: f32[2,1,64], index: 3, kind: output, shape index: {1}]
  %s4 = inlined_call_operand.vmem [shape: f32[2,1,64], index: 4, kind: output, shape index: {2}]
  %5 = xla_tuple %s2, %s3, %s4
  %s6 = sld [smem:[#allocation0]]
  $region65: #{conv2d.1} parent=0
    _
  %s8 = ssub.s32 1, %s6
  %s9 = scalar_select 0, %s8, %s6
  $region1: #{conv2d.1} parent=0
    #allocation3 [shape = 'u8[262144]{0}', space=vmem, size = 0x40000, scoped, tag = 'output window, operand 0']
    #allocation4 [shape = 's32[2]{0}', space=sflag, size = 0x8, scoped, tag = 'scoped memory for conv2d.1']
    %10 = vsyncpa [#allocation4], 0
    %s11 = scalar_lea.sflag [#allocation4], 1
    %12 = vsyncpa %s11, 0
    loop: start=0, step=1, limit=4
    $region2: #{conv2d.1} parent=1 // loop_pre_header
      _
    $region3: #{conv2d.1} parent=1 // loop_header
      %s14 = sphi 0, %s18
      %p15 = scmp.ge.s32.totalorder %s14, 4
      %s21 = sphi 0, %s40
      %s22 = sphi 0, %s36
      %s23 = sphi 0, %s32
      %s24 = sphi 0, %s21
      %s25 = sphi 0, %s22
      %s26 = sphi 0, %s23
      %s27 = sphi 0, %s24
      %s28 = sphi 0, %s25
      %s29 = sphi 0, %s26
      %s45 = sphi 0, %s47
      %s48 = sphi 0, %s45
      %s49 = sphi 0, %s48
      %s65 = sphi 0, %s49
      %s73 = sphi 0, %s75
      %s76 = sphi 0, %s73
      %s77 = sphi 0, %s76
      %s93 = sphi 0, %s77
      %s101 = sphi 0, %s103
      %s104 = sphi 0, %s101
      %s105 = sphi 0, %s104
      %s121 = sphi 0, %s105
      %s129 = sphi 0, %s131
      %s132 = sphi 0, %s129
      %s133 = sphi 0, %s132
      %s149 = sphi 0, %s133
      %s157 = sphi 0, %s159
      %s160 = sphi 0, %s157
      %s161 = sphi 0, %s160
      %s177 = sphi 0, %s161
    $region4: #{conv2d.1} parent=1 // loop_header_branch
      %17 = sbr.rel (%p15) target = $region8
    $region5: #{conv2d.1} parent=1 // loop_body
      %s19 = ssub.s32 %s14, 1
      %s20 = ssub.s32 %s14, 2
      %s30 = sadd.s32 1, %s23
      %p31 = scmp.ge.s32.totalorder %s30, 1
      %s32 = scalar_select %p31, 0, %s30
      %s33 = sadd.s32 1, %s22
      %s34 = scalar_select %p31, %s33, %s22
      %p35 = scmp.ge.s32.totalorder %s34, 1
      %s36 = scalar_select %p35, 0, %s34
      %s37 = sadd.s32 1, %s21
      %s38 = scalar_select %p35, %s37, %s21
      %p39 = scmp.ge.s32.totalorder %s38, 2
      %s40 = scalar_select %p39, 0, %s38
      %s41 = ssub.s32 %s21, %s40
      %s42 = ssub.s32 %s23, %s32
      %s43 = sor.u32 %s41, %s42
      %p44 = scmp.eq.s32.totalorder %s43, 0
      %s46 = sadd.s32 %s45, 1
      %s47 = scalar_select %p44, %s45, %s46
      %p50 = pneg %p44
      %p51 = scmp.eq.s32.totalorder %s14, 1
      %p52 = por %p50, %p51
      %p53 = scmp.ne.s32.totalorder %s45, %s48
      %p54 = scmp.eq.s32.totalorder %s14, 0
      %p55 = por %p53, %p54
      %p56 = scmp.ne.s32.totalorder %s45, %s48
      %p57 = scmp.eq.s32.totalorder %s19, 1
      %p58 = por %p56, %p57
      %p59 = scmp.ne.s32.totalorder %s48, %s49
      %p60 = scmp.eq.s32.totalorder %s19, 0
      %p61 = por %p59, %p60
      %p62 = scmp.ne.s32.totalorder %s48, %s49
      %p63 = scmp.eq.s32.totalorder %s20, 1
      %p64 = por %p62, %p63
      %p66 = scmp.ne.s32.totalorder %s49, %s65
      %p67 = scmp.eq.s32.totalorder %s20, 0
      %p68 = por %p66, %p67
      %s69 = ssub.s32 %s23, %s32
      %s70 = ssub.s32 %s22, %s36
      %s71 = sor.u32 %s69, %s70
      %p72 = scmp.eq.s32.totalorder %s71, 0
      %s74 = sadd.s32 %s73, 1
      %s75 = scalar_select %p72, %s73, %s74
      %p78 = pneg %p72
      %p79 = scmp.eq.s32.totalorder %s14, 1
      %p80 = por %p78, %p79
      %p81 = scmp.ne.s32.totalorder %s73, %s76
      %p82 = scmp.eq.s32.totalorder %s14, 0
      %p83 = por %p81, %p82
      %p84 = scmp.ne.s32.totalorder %s73, %s76
      %p85 = scmp.eq.s32.totalorder %s19, 1
      %p86 = por %p84, %p85
      %p87 = scmp.ne.s32.totalorder %s76, %s77
      %p88 = scmp.eq.s32.totalorder %s19, 0
      %p89 = por %p87, %p88
      %p90 = scmp.ne.s32.totalorder %s76, %s77
      %p91 = scmp.eq.s32.totalorder %s20, 1
      %p92 = por %p90, %p91
      %p94 = scmp.ne.s32.totalorder %s77, %s93
      %p95 = scmp.eq.s32.totalorder %s20, 0
      %p96 = por %p94, %p95
      %s97 = ssub.s32 %s21, %s40
      %s98 = ssub.s32 %s22, %s36
      %s99 = sor.u32 %s97, %s98
      %p100 = scmp.eq.s32.totalorder %s99, 0
      %s102 = sadd.s32 %s101, 1
      %s103 = scalar_select %p100, %s101, %s102
      %p106 = pneg %p100
      %p107 = scmp.eq.s32.totalorder %s14, 1
      %p108 = por %p106, %p107
      %p109 = scmp.ne.s32.totalorder %s101, %s104
      %p110 = scmp.eq.s32.totalorder %s14, 0
      %p111 = por %p109, %p110
      %p112 = scmp.ne.s32.totalorder %s101, %s104
      %p113 = scmp.eq.s32.totalorder %s19, 1
      %p114 = por %p112, %p113
      %p115 = scmp.ne.s32.totalorder %s104, %s105
      %p116 = scmp.eq.s32.totalorder %s19, 0
      %p117 = por %p115, %p116
      %p118 = scmp.ne.s32.totalorder %s104, %s105
      %p119 = scmp.eq.s32.totalorder %s20, 1
      %p120 = por %p118, %p119
      %p122 = scmp.ne.s32.totalorder %s105, %s121
      %p123 = scmp.eq.s32.totalorder %s20, 0
      %p124 = por %p122, %p123
      %s125 = ssub.s32 %s21, %s40
      %s126 = ssub.s32 %s22, %s36
      %s127 = sor.u32 %s125, %s126
      %p128 = scmp.eq.s32.totalorder %s127, 0
      %s130 = sadd.s32 %s129, 1
      %s131 = scalar_select %p128, %s129, %s130
      %p134 = pneg %p128
      %p135 = scmp.eq.s32.totalorder %s14, 1
      %p136 = por %p134, %p135
      %p137 = scmp.ne.s32.totalorder %s129, %s132
      %p138 = scmp.eq.s32.totalorder %s14, 0
      %p139 = por %p137, %p138
      %p140 = scmp.ne.s32.totalorder %s129, %s132
      %p141 = scmp.eq.s32.totalorder %s19, 1
      %p142 = por %p140, %p141
      %p143 = scmp.ne.s32.totalorder %s132, %s133
      %p144 = scmp.eq.s32.totalorder %s19, 0
      %p145 = por %p143, %p144
      %p146 = scmp.ne.s32.totalorder %s132, %s133
      %p147 = scmp.eq.s32.totalorder %s20, 1
      %p148 = por %p146, %p147
      %p150 = scmp.ne.s32.totalorder %s133, %s149
      %p151 = scmp.eq.s32.totalorder %s20, 0
      %p152 = por %p150, %p151
      %s153 = ssub.s32 %s21, %s40
      %s154 = ssub.s32 %s22, %s36
      %s155 = sor.u32 %s153, %s154
      %p156 = scmp.eq.s32.totalorder %s155, 0
      %s158 = sadd.s32 %s157, 1
      %s159 = scalar_select %p156, %s157, %s158
      %p162 = pneg %p156
      %p163 = scmp.eq.s32.totalorder %s14, 1
      %p164 = por %p162, %p163
      %p165 = scmp.ne.s32.totalorder %s157, %s160
      %p166 = scmp.eq.s32.totalorder %s14, 0
      %p167 = por %p165, %p166
      %p168 = scmp.ne.s32.totalorder %s157, %s160
      %p169 = scmp.eq.s32.totalorder %s19, 1
      %p170 = por %p168, %p169
      %p171 = scmp.ne.s32.totalorder %s160, %s161
      %p172 = scmp.eq.s32.totalorder %s19, 0
      %p173 = por %p171, %p172
      %p174 = scmp.ne.s32.totalorder %s160, %s161
      %p175 = scmp.eq.s32.totalorder %s20, 1
      %p176 = por %p174, %p175
      %p178 = scmp.ne.s32.totalorder %s161, %s177
      %p179 = scmp.eq.s32.totalorder %s20, 0
      %p180 = por %p178, %p179
      %p181 = scmp.le.s32.totalorder 1, %s14
      %p182 = scmp.lt.s32.totalorder %s14, 3
      %p183 = pnand %p181, %p182
      %p184 = pneg %p183
      // Predicated region
      $region9: #{conv2d.1} parent=5 // pred_check
        _
      $region10: #{conv2d.1} parent=5 // pred_check_branch
        %186 = sbr.rel (%p183) target = $region12
      $region11: #{conv2d.1} parent=5 // pred_region
        %s187 = ssub.s32 %s14, 1
        // Predicated region
        $region13: #{conv2d.1} parent=11 // pred_check
          %p188 = pneg %p89
        $region14: #{conv2d.1} parent=11 // pred_check_branch
          %190 = sbr.rel (%p188) target = $region16
        $region15: #{conv2d.1} parent=11 // pred_region
          %s191 = smul.u32 32, %s26
          %p192 = scmp.lt.s32.totalorder %s191, 31
          %s193 = scalar_select %p192, %s191, 31
          %p194 = scmp.lt.s32.totalorder %s25, 0
          %s195 = scalar_select %p194, %s25, 0
          %s196 = sadd.s32 %s195, %s193
          %s197 = smul.addr %s196, 4
          %s198 = scalar_lea.vmem %s1, %s197
          %s199 = smul.u32 32, %s26
        $region16: #{conv2d.1} parent=11 // pred_fallthru
          _
      $region12: #{conv2d.1} parent=5 // pred_fallthru
        _
      %p200 = scmp.lt.s32.totalorder %s14, 2
      // Predicated region
      $region17: #{conv2d.1} parent=5 // pred_check
        %p201 = pneg %p200
      $region18: #{conv2d.1} parent=5 // pred_check_branch
        %203 = sbr.rel (%p201) target = $region20
      $region19: #{conv2d.1} parent=5 // pred_region
        // Predicated region
        $region21: #{conv2d.1} parent=19 // pred_check
          %p204 = pneg %p55
        $region22: #{conv2d.1} parent=19 // pred_check_branch
          %206 = sbr.rel (%p204) target = $region24
        $region23: #{conv2d.1} parent=19 // pred_region
          %s207 = smul.u32 32, %s21
          %s208 = smul.u32 2, %s23
          %p209 = scmp.lt.s32.totalorder %s207, 63
          %s210 = scalar_select %p209, %s207, 63
          %p211 = scmp.lt.s32.totalorder %s208, 1
          %s212 = scalar_select %p211, %s208, 1
          %s213 = smul.addr %s210, 2
          %s214 = sadd.s32 %s212, %s213
          %s215 = smul.addr %s214, 4
          %s216 = scalar_lea.vmem %s0, %s215
          %s217 = smul.u32 32, %s21
          %s218 = smul.u32 2, %s23
        $region24: #{conv2d.1} parent=19 // pred_fallthru
          _
      $region20: #{conv2d.1} parent=5 // pred_fallthru
        _
      %p219 = scmp.le.s32.totalorder 1, %s14
      %p220 = scmp.lt.s32.totalorder %s14, 3
      %p221 = pnand %p219, %p220
      %p222 = pneg %p221
      // Predicated region
      $region25: #{conv2d.1} parent=5 // pred_check
        _
      $region26: #{conv2d.1} parent=5 // pred_check_branch
        %224 = sbr.rel (%p221) target = $region28
      $region27: #{conv2d.1} parent=5 // pred_region
        %s225 = ssub.s32 %s14, 1
        %s226 = smul.u32 32, %s24
        %s227 = smul.u32 2, %s26
        %p228 = scmp.lt.s32.totalorder %s226, 63
        %s229 = scalar_select %p228, %s226, 63
        %p230 = scmp.lt.s32.totalorder %s227, 1
        %s231 = scalar_select %p230, %s227, 1
        %s232 = smul.addr %s229, 2
        %s233 = sadd.s32 %s231, %s232
        %s234 = smul.addr %s233, 4
        %s235 = scalar_lea.vmem %s0, %s234
        %p236 = pneg %p61
        %p237 = pneg %p58
        %s238 = smul.u32 32, %s26
        %p239 = scmp.lt.s32.totalorder %s238, 31
        %s240 = scalar_select %p239, %s238, 31
        %p241 = scmp.lt.s32.totalorder %s25, 0
        %s242 = scalar_select %p241, %s25, 0
        %s243 = sadd.s32 %s242, %s240
        %s244 = smul.addr %s243, 4
        %s245 = scalar_lea.vmem %s1, %s244
        %p246 = pneg %p89
        %p247 = pneg %p86
        %p248 = pneg %p117
        %p249 = pneg %p114
        %s250 = sand.u32 %s104, 1
        %s251 = scalar_lea.sflag [#allocation4], %s250
        %s252 = sand.u32 %s104, 1
        %s253 = smul.addr %s252, 256
        %s254 = scalar_lea.vmem [#allocation3], %s253
        %p255 = pneg %p145
        %p256 = pneg %p142
        %p257 = scmp.lt.s32.totalorder %s24, 1
        %s258 = scalar_select %p257, %s24, 1
        %p259 = scmp.lt.s32.totalorder %s25, 0
        %s260 = scalar_select %p259, %s25, 0
        %s261 = sadd.s32 %s260, %s258
        %s262 = scalar_lea.vmem %s3, %s261
        %p263 = pneg %p173
        %p264 = pneg %p170
        %p265 = scmp.lt.s32.totalorder %s24, 1
        %s266 = scalar_select %p265, %s24, 1
        %p267 = scmp.lt.s32.totalorder %s25, 0
        %s268 = scalar_select %p267, %s25, 0
        %s269 = sadd.s32 %s268, %s266
        %s270 = scalar_lea.vmem %s4, %s269
        %s271 = smul.u32 32, %s24
        %s272 = smul.u32 2, %s26
        %p273 = scmp.lt.s32.totalorder %s271, 63
        %s274 = scalar_select %p273, %s271, 63
        %p275 = scmp.lt.s32.totalorder %s272, 1
        %s276 = scalar_select %p275, %s272, 1
        %s277 = smul.addr %s274, 2
        %s278 = sadd.s32 %s276, %s277
        %s279 = smul.addr %s278, 4
        %s280 = scalar_lea.vmem %s0, %s279
        %s281 = smul.u32 32, %s24
        %s282 = smul.u32 2, %s26
        %s283 = smul.u32 32, %s26
        %p284 = scmp.lt.s32.totalorder %s283, 31
        %s285 = scalar_select %p284, %s283, 31
        %p286 = scmp.lt.s32.totalorder %s25, 0
        %s287 = scalar_select %p286, %s25, 0
        %s288 = sadd.s32 %s287, %s285
        %s289 = smul.addr %s288, 4
        %s290 = scalar_lea.vmem %s1, %s289
        %s291 = smul.u32 32, %s26
        %s292 = smul.u32 32, %s24
        %p293 = scmp.lt.s32.totalorder %s24, 1
        %s294 = scalar_select %p293, %s24, 1
        %p295 = scmp.lt.s32.totalorder %s25, 0
        %s296 = scalar_select %p295, %s25, 0
        %s297 = sadd.s32 %s296, %s294
        %s298 = scalar_lea.vmem %s3, %s297
        %p299 = scmp.lt.s32.totalorder %s24, 1
        %s300 = scalar_select %p299, %s24, 1
        %p301 = scmp.lt.s32.totalorder %s25, 0
        %s302 = scalar_select %p301, %s25, 0
        %s303 = sadd.s32 %s302, %s300
        %s304 = scalar_lea.vmem %s4, %s303
        %p306 = scmp.eq.s32.totalorder %s26, 0
        // Predicated region
        $region29: #{conv2d.1} parent=27 // pred_check
          %p307 = pneg %p306
        $region30: #{conv2d.1} parent=27 // pred_check_branch
          %309 = sbr.rel (%p307) target = $region32
        $region31: #{conv2d.1} parent=27 // pred_region
          %vm310 = vcmask 523264
          %311 = vst.msk [vmem:[#allocation2] sm:$0xff] %vm310, 0.0
          %312 = vst.msk [vmem:[#allocation2 + $0x8] sm:$0xff] %vm310, 0.0
          %313 = vst.msk [vmem:[#allocation2 + $0x10] sm:$0xff] %vm310, 0.0
          %314 = vst.msk [vmem:[#allocation2 + $0x18] sm:$0xff] %vm310, 0.0
          %315 = vst.msk [vmem:[#allocation2 + $0x20] sm:$0xff] %vm310, 0.0
          %316 = vst.msk [vmem:[#allocation2 + $0x28] sm:$0xff] %vm310, 0.0
          %317 = vst.msk [vmem:[#allocation2 + $0x30] sm:$0xff] %vm310, 0.0
          %318 = vst.msk [vmem:[#allocation2 + $0x38] sm:$0xff] %vm310, 0.0
          %319 = vst.msk [vmem:[#allocation2 + $0x40] sm:$0xff] %vm310, 0.0
          %320 = vst.msk [vmem:[#allocation2 + $0x48] sm:$0xff] %vm310, 0.0
          %321 = vst.msk [vmem:[#allocation2 + $0x50] sm:$0xff] %vm310, 0.0
          %322 = vst.msk [vmem:[#allocation2 + $0x58] sm:$0xff] %vm310, 0.0
          %323 = vst.msk [vmem:[#allocation2 + $0x60] sm:$0xff] %vm310, 0.0
          %324 = vst.msk [vmem:[#allocation2 + $0x68] sm:$0xff] %vm310, 0.0
          %325 = vst.msk [vmem:[#allocation2 + $0x70] sm:$0xff] %vm310, 0.0
          %326 = vst.msk [vmem:[#allocation2 + $0x78] sm:$0xff] %vm310, 0.0
          %327 = vst.msk [vmem:[#allocation2 + $0x80] sm:$0xff] %vm310, 0.0
          %328 = vst.msk [vmem:[#allocation2 + $0x88] sm:$0xff] %vm310, 0.0
          %329 = vst.msk [vmem:[#allocation2 + $0x90] sm:$0xff] %vm310, 0.0
          %330 = vst.msk [vmem:[#allocation2 + $0x98] sm:$0xff] %vm310, 0.0
          %331 = vst.msk [vmem:[#allocation2 + $0xa0] sm:$0xff] %vm310, 0.0
          %332 = vst.msk [vmem:[#allocation2 + $0xa8] sm:$0xff] %vm310, 0.0
          %333 = vst.msk [vmem:[#allocation2 + $0xb0] sm:$0xff] %vm310, 0.0
          %334 = vst.msk [vmem:[#allocation2 + $0xb8] sm:$0xff] %vm310, 0.0
          %335 = vst.msk [vmem:[#allocation2 + $0xc0] sm:$0xff] %vm310, 0.0
          %336 = vst.msk [vmem:[#allocation2 + $0xc8] sm:$0xff] %vm310, 0.0
          %337 = vst.msk [vmem:[#allocation2 + $0xd0] sm:$0xff] %vm310, 0.0
          %338 = vst.msk [vmem:[#allocation2 + $0xd8] sm:$0xff] %vm310, 0.0
          %339 = vst.msk [vmem:[#allocation2 + $0xe0] sm:$0xff] %vm310, 0.0
          %340 = vst.msk [vmem:[#allocation2 + $0xe8] sm:$0xff] %vm310, 0.0
          %341 = vst.msk [vmem:[#allocation2 + $0xf0] sm:$0xff] %vm310, 0.0
          %342 = vst.msk [vmem:[#allocation2 + $0xf8] sm:$0xff] %vm310, 0.0
        $region32: #{conv2d.1} parent=27 // pred_fallthru
          _
        %v343 = vld [vmem:[#allocation2] sm:$0xff]
        %v344 = vld [vmem:[#allocation2 + $0x8] sm:$0xff]
        %v345 = vld [vmem:[#allocation2 + $0x10] sm:$0xff]
        %v346 = vld [vmem:[#allocation2 + $0x18] sm:$0xff]
        %v347 = vld [vmem:[#allocation2 + $0x20] sm:$0xff]
        %v348 = vld [vmem:[#allocation2 + $0x28] sm:$0xff]
        %v349 = vld [vmem:[#allocation2 + $0x30] sm:$0xff]
        %v350 = vld [vmem:[#allocation2 + $0x38] sm:$0xff]
        %v351 = vld [vmem:[#allocation2 + $0x40] sm:$0xff]
        %v352 = vld [vmem:[#allocation2 + $0x48] sm:$0xff]
        %v353 = vld [vmem:[#allocation2 + $0x50] sm:$0xff]
        %v354 = vld [vmem:[#allocation2 + $0x58] sm:$0xff]
        %v355 = vld [vmem:[#allocation2 + $0x60] sm:$0xff]
        %v356 = vld [vmem:[#allocation2 + $0x68] sm:$0xff]
        %v357 = vld [vmem:[#allocation2 + $0x70] sm:$0xff]
        %v358 = vld [vmem:[#allocation2 + $0x78] sm:$0xff]
        %v359 = vld [vmem:[#allocation2 + $0x80] sm:$0xff]
        %v360 = vld [vmem:[#allocation2 + $0x88] sm:$0xff]
        %v361 = vld [vmem:[#allocation2 + $0x90] sm:$0xff]
        %v362 = vld [vmem:[#allocation2 + $0x98] sm:$0xff]
        %v363 = vld [vmem:[#allocation2 + $0xa0] sm:$0xff]
        %v364 = vld [vmem:[#allocation2 + $0xa8] sm:$0xff]
        %v365 = vld [vmem:[#allocation2 + $0xb0] sm:$0xff]
        %v366 = vld [vmem:[#allocation2 + $0xb8] sm:$0xff]
        %v367 = vld [vmem:[#allocation2 + $0xc0] sm:$0xff]
        %v368 = vld [vmem:[#allocation2 + $0xc8] sm:$0xff]
        %v369 = vld [vmem:[#allocation2 + $0xd0] sm:$0xff]
        %v370 = vld [vmem:[#allocation2 + $0xd8] sm:$0xff]
        %v371 = vld [vmem:[#allocation2 + $0xe0] sm:$0xff]
        %v372 = vld [vmem:[#allocation2 + $0xe8] sm:$0xff]
        %v373 = vld [vmem:[#allocation2 + $0xf0] sm:$0xff]
        %v374 = vld [vmem:[#allocation2 + $0xf8] sm:$0xff]
        %v375 = vld [vmem:[%s280] sm:$0xff]
        %v376 = vld [vmem:[%s280 + $0x8] sm:$0xff]
        %v377 = vld [vmem:[%s280 + $0x10] sm:$0xff]
        %v378 = vld [vmem:[%s280 + $0x18] sm:$0xff]
        %v379 = vld [vmem:[%s280 + $0x20] sm:$0xff]
        %v380 = vld [vmem:[%s280 + $0x28] sm:$0xff]
        %v381 = vld [vmem:[%s280 + $0x30] sm:$0xff]
        %v382 = vld [vmem:[%s280 + $0x38] sm:$0xff]
        %v383 = vld [vmem:[%s280 + $0x40] sm:$0xff]
        %v384 = vld [vmem:[%s280 + $0x48] sm:$0xff]
        %v385 = vld [vmem:[%s280 + $0x50] sm:$0xff]
        %v386 = vld [vmem:[%s280 + $0x58] sm:$0xff]
        %v387 = vld [vmem:[%s280 + $0x60] sm:$0xff]
        %v388 = vld [vmem:[%s280 + $0x68] sm:$0xff]
        %v389 = vld [vmem:[%s280 + $0x70] sm:$0xff]
        %v390 = vld [vmem:[%s280 + $0x78] sm:$0xff]
        %v391 = vld [vmem:[%s280 + $0x80] sm:$0xff]
        %v392 = vld [vmem:[%s280 + $0x88] sm:$0xff]
        %v393 = vld [vmem:[%s280 + $0x90] sm:$0xff]
        %v394 = vld [vmem:[%s280 + $0x98] sm:$0xff]
        %v395 = vld [vmem:[%s280 + $0xa0] sm:$0xff]
        %v396 = vld [vmem:[%s280 + $0xa8] sm:$0xff]
        %v397 = vld [vmem:[%s280 + $0xb0] sm:$0xff]
        %v398 = vld [vmem:[%s280 + $0xb8] sm:$0xff]
        %v399 = vld [vmem:[%s280 + $0xc0] sm:$0xff]
        %v400 = vld [vmem:[%s280 + $0xc8] sm:$0xff]
        %v401 = vld [vmem:[%s280 + $0xd0] sm:$0xff]
        %v402 = vld [vmem:[%s280 + $0xd8] sm:$0xff]
        %v403 = vld [vmem:[%s280 + $0xe0] sm:$0xff]
        %v404 = vld [vmem:[%s280 + $0xe8] sm:$0xff]
        %v405 = vld [vmem:[%s280 + $0xf0] sm:$0xff]
        %v406 = vld [vmem:[%s280 + $0xf8] sm:$0xff]
        %v407 = vld [vmem:[%s290] sm:$0xf]
        %v408 = vld [vmem:[%s290 + $0x4] sm:$0xf]
        %v409 = vld [vmem:[%s290 + $0x8] sm:$0xf]
        %v410 = vld [vmem:[%s290 + $0xc] sm:$0xf]
        %v411 = vld [vmem:[%s290 + $0x10] sm:$0xf]
        %v412 = vld [vmem:[%s290 + $0x14] sm:$0xf]
        %v413 = vld [vmem:[%s290 + $0x18] sm:$0xf]
        %v414 = vld [vmem:[%s290 + $0x1c] sm:$0xf]
        %v415 = vld [vmem:[%s290 + $0x20] sm:$0xf]
        %v416 = vld [vmem:[%s290 + $0x24] sm:$0xf]
        %v417 = vld [vmem:[%s290 + $0x28] sm:$0xf]
        %v418 = vld [vmem:[%s290 + $0x2c] sm:$0xf]
        %v419 = vld [vmem:[%s290 + $0x30] sm:$0xf]
        %v420 = vld [vmem:[%s290 + $0x34] sm:$0xf]
        %v421 = vld [vmem:[%s290 + $0x38] sm:$0xf]
        %v422 = vld [vmem:[%s290 + $0x3c] sm:$0xf]
        %v423 = vld [vmem:[%s290 + $0x40] sm:$0xf]
        %v424 = vld [vmem:[%s290 + $0x44] sm:$0xf]
        %v425 = vld [vmem:[%s290 + $0x48] sm:$0xf]
        %v426 = vld [vmem:[%s290 + $0x4c] sm:$0xf]
        %v427 = vld [vmem:[%s290 + $0x50] sm:$0xf]
        %v428 = vld [vmem:[%s290 + $0x54] sm:$0xf]
        %v429 = vld [vmem:[%s290 + $0x58] sm:$0xf]
        %v430 = vld [vmem:[%s290 + $0x5c] sm:$0xf]
        %v431 = vld [vmem:[%s290 + $0x60] sm:$0xf]
        %v432 = vld [vmem:[%s290 + $0x64] sm:$0xf]
        %v433 = vld [vmem:[%s290 + $0x68] sm:$0xf]
        %v434 = vld [vmem:[%s290 + $0x6c] sm:$0xf]
        %v435 = vld [vmem:[%s290 + $0x70] sm:$0xf]
        %v436 = vld [vmem:[%s290 + $0x74] sm:$0xf]
        %v437 = vld [vmem:[%s290 + $0x78] sm:$0xf]
        %v438 = vld [vmem:[%s290 + $0x7c] sm:$0xf]
        %v471 = vunpack.c.l.b16 %v375
        %v472 = vunpack.c.h.b16 %v375
        %v473 = vunpack.c.l.b16 %v376
        %v474 = vunpack.c.h.b16 %v376
        %v475 = vunpack.c.l.b16 %v377
        %v476 = vunpack.c.h.b16 %v377
        %v477 = vunpack.c.l.b16 %v378
        %v478 = vunpack.c.h.b16 %v378
        %v479 = vunpack.c.l.b16 %v379
        %v480 = vunpack.c.h.b16 %v379
        %v481 = vunpack.c.l.b16 %v380
        %v482 = vunpack.c.h.b16 %v380
        %v483 = vunpack.c.l.b16 %v381
        %v484 = vunpack.c.h.b16 %v381
        %v485 = vunpack.c.l.b16 %v382
        %v486 = vunpack.c.h.b16 %v382
        %v487 = vunpack.c.l.b16 %v383
        %v488 = vunpack.c.h.b16 %v383
        %v489 = vunpack.c.l.b16 %v384
        %v490 = vunpack.c.h.b16 %v384
        %v491 = vunpack.c.l.b16 %v385
        %v492 = vunpack.c.h.b16 %v385
        %v493 = vunpack.c.l.b16 %v386
        %v494 = vunpack.c.h.b16 %v386
        %v495 = vunpack.c.l.b16 %v387
        %v496 = vunpack.c.h.b16 %v387
        %v497 = vunpack.c.l.b16 %v388
        %v498 = vunpack.c.h.b16 %v388
        %v499 = vunpack.c.l.b16 %v389
        %v500 = vunpack.c.h.b16 %v389
        %v501 = vunpack.c.l.b16 %v390
        %v502 = vunpack.c.h.b16 %v390
        %v503 = vunpack.c.l.b16 %v391
        %v504 = vunpack.c.h.b16 %v391
        %v505 = vunpack.c.l.b16 %v392
        %v506 = vunpack.c.h.b16 %v392
        %v507 = vunpack.c.l.b16 %v393
        %v508 = vunpack.c.h.b16 %v393
        %v509 = vunpack.c.l.b16 %v394
        %v510 = vunpack.c.h.b16 %v394
        %v511 = vunpack.c.l.b16 %v395
        %v512 = vunpack.c.h.b16 %v395
        %v513 = vunpack.c.l.b16 %v396
        %v514 = vunpack.c.h.b16 %v396
        %v515 = vunpack.c.l.b16 %v397
        %v516 = vunpack.c.h.b16 %v397
        %v517 = vunpack.c.l.b16 %v398
        %v518 = vunpack.c.h.b16 %v398
        %v519 = vunpack.c.l.b16 %v399
        %v520 = vunpack.c.h.b16 %v399
        %v521 = vunpack.c.l.b16 %v400
        %v522 = vunpack.c.h.b16 %v400
        %v523 = vunpack.c.l.b16 %v401
        %v524 = vunpack.c.h.b16 %v401
        %v525 = vunpack.c.l.b16 %v402
        %v526 = vunpack.c.h.b16 %v402
        %v527 = vunpack.c.l.b16 %v403
        %v528 = vunpack.c.h.b16 %v403
        %v529 = vunpack.c.l.b16 %v404
        %v530 = vunpack.c.h.b16 %v404
        %v531 = vunpack.c.l.b16 %v405
        %v532 = vunpack.c.h.b16 %v405
        %v533 = vunpack.c.l.b16 %v406
        %v534 = vunpack.c.h.b16 %v406
        %v535 = vpack.c.b16 %v473, %v471
        %v536 = vpack.c.b16 %v474, %v472
        %v537 = vpack.c.b16 %v477, %v475
        %v538 = vpack.c.b16 %v478, %v476
        %v539 = vpack.c.b16 %v481, %v479
        %v540 = vpack.c.b16 %v482, %v480
        %v541 = vpack.c.b16 %v485, %v483
        %v542 = vpack.c.b16 %v486, %v484
        %v543 = vpack.c.b16 %v489, %v487
        %v544 = vpack.c.b16 %v490, %v488
        %v545 = vpack.c.b16 %v493, %v491
        %v546 = vpack.c.b16 %v494, %v492
        %v547 = vpack.c.b16 %v497, %v495
        %v548 = vpack.c.b16 %v498, %v496
        %v549 = vpack.c.b16 %v501, %v499
        %v550 = vpack.c.b16 %v502, %v500
        %v551 = vpack.c.b16 %v505, %v503
        %v552 = vpack.c.b16 %v506, %v504
        %v553 = vpack.c.b16 %v509, %v507
        %v554 = vpack.c.b16 %v510, %v508
        %v555 = vpack.c.b16 %v513, %v511
        %v556 = vpack.c.b16 %v514, %v512
        %v557 = vpack.c.b16 %v517, %v515
        %v558 = vpack.c.b16 %v518, %v516
        %v559 = vpack.c.b16 %v521, %v519
        %v560 = vpack.c.b16 %v522, %v520
        %v561 = vpack.c.b16 %v525, %v523
        %v562 = vpack.c.b16 %v526, %v524
        %v563 = vpack.c.b16 %v529, %v527
        %v564 = vpack.c.b16 %v530, %v528
        %v565 = vpack.c.b16 %v533, %v531
        %v566 = vpack.c.b16 %v534, %v532
        %v631 = vunpack.c.l.b16 %v407
        %v632 = vunpack.c.l.b16 %v408
        %v633 = vunpack.c.l.b16 %v409
        %v634 = vunpack.c.l.b16 %v410
        %v635 = vunpack.c.l.b16 %v411
        %v636 = vunpack.c.l.b16 %v412
        %v637 = vunpack.c.l.b16 %v413
        %v638 = vunpack.c.l.b16 %v414
        %v639 = vunpack.c.l.b16 %v415
        %v640 = vunpack.c.l.b16 %v416
        %v641 = vunpack.c.l.b16 %v417
        %v642 = vunpack.c.l.b16 %v418
        %v643 = vunpack.c.l.b16 %v419
        %v644 = vunpack.c.l.b16 %v420
        %v645 = vunpack.c.l.b16 %v421
        %v646 = vunpack.c.l.b16 %v422
        %v647 = vunpack.c.l.b16 %v423
        %v648 = vunpack.c.l.b16 %v424
        %v649 = vunpack.c.l.b16 %v425
        %v650 = vunpack.c.l.b16 %v426
        %v651 = vunpack.c.l.b16 %v427
        %v652 = vunpack.c.l.b16 %v428
        %v653 = vunpack.c.l.b16 %v429
        %v654 = vunpack.c.l.b16 %v430
        %v655 = vunpack.c.l.b16 %v431
        %v656 = vunpack.c.l.b16 %v432
        %v657 = vunpack.c.l.b16 %v433
        %v658 = vunpack.c.l.b16 %v434
        %v659 = vunpack.c.l.b16 %v435
        %v660 = vunpack.c.l.b16 %v436
        %v661 = vunpack.c.l.b16 %v437
        %v662 = vunpack.c.l.b16 %v438
        %v663 = vpack.c.b16 %v632, %v631
        %v664 = vpack.c.b16 %v634, %v633
        %v665 = vpack.c.b16 %v636, %v635
        %v666 = vpack.c.b16 %v638, %v637
        %v667 = vpack.c.b16 %v640, %v639
        %v668 = vpack.c.b16 %v642, %v641
        %v669 = vpack.c.b16 %v644, %v643
        %v670 = vpack.c.b16 %v646, %v645
        %v671 = vpack.c.b16 %v648, %v647
        %v672 = vpack.c.b16 %v650, %v649
        %v673 = vpack.c.b16 %v652, %v651
        %v674 = vpack.c.b16 %v654, %v653
        %v675 = vpack.c.b16 %v656, %v655
        %v676 = vpack.c.b16 %v658, %v657
        %v677 = vpack.c.b16 %v660, %v659
        %v678 = vpack.c.b16 %v662, %v661
        %695 = vmatprep.subr.bf16.mxu0 0
        %696 = vmatpush1.bf16.msra.mxu0 %v670
        %697 = vmatprep.subr.bf16.mxu0 0
        %698 = vmatpush1.bf16.msra.mxu0 %v669
        %699 = vmatprep.subr.bf16.mxu0 0
        %700 = vmatpush1.bf16.msra.mxu0 %v668
        %701 = vmatprep.subr.bf16.mxu0 0
        %702 = vmatpush1.bf16.msra.mxu0 %v667
        %703 = vmatprep.subr.bf16.mxu0 0
        %704 = vmatpush1.bf16.msra.mxu0 %v666
        %705 = vmatprep.subr.bf16.mxu0 0
        %706 = vmatpush1.bf16.msra.mxu0 %v665
        %707 = vmatprep.subr.bf16.mxu0 0
        %708 = vmatpush1.bf16.msra.mxu0 %v664
        %709 = vmatprep.subr.bf16.mxu0 0
        %710 = vmatpush1.bf16.msra.mxu0 %v663
        %711 = vmatprep.subr.bf16.mxu0 0
        %712 = vmatpush2.bf16.msra.mxu0 %v678
        %713 = vmatprep.subr.bf16.mxu0 0
        %714 = vmatpush2.bf16.msra.mxu0 %v677
        %715 = vmatprep.subr.bf16.mxu0 0
        %716 = vmatpush2.bf16.msra.mxu0 %v676
        %717 = vmatprep.subr.bf16.mxu0 0
        %718 = vmatpush2.bf16.msra.mxu0 %v675
        %719 = vmatprep.subr.bf16.mxu0 0
        %720 = vmatpush2.bf16.msra.mxu0 %v674
        %721 = vmatprep.subr.bf16.mxu0 0
        %722 = vmatpush2.bf16.msra.mxu0 %v673
        %723 = vmatprep.subr.bf16.mxu0 0
        %724 = vmatpush2.bf16.msra.mxu0 %v672
        %725 = vmatprep.subr.bf16.mxu0 0
        %726 = vmatpush2.bf16.msra.mxu0 %v671
        %727 = vmatprep.mubr.bf16.mxu0 %v536
        %728 = vmatmul.mubr.bf16.gmra.mxu0 %v535
        %v729 = vpop.f32.mrf.mxu0
        %v730 = vadd.f32 0.0, %v729
        %v731 = vpop.f32.mrf.mxu0
        %v732 = vpop.f32.mrf.mxu0
        %v733 = vadd.f32 0.0, %v732
        %v734 = vpop.f32.mrf.mxu0
        %735 = vmatprep.mubr.bf16.mxu0 %v538
        %736 = vmatmul.mubr.bf16.gmra.mxu0 %v537
        %v737 = vpop.f32.mrf.mxu0
        %v738 = vadd.f32 0.0, %v737
        %v739 = vpop.f32.mrf.mxu0
        %v740 = vpop.f32.mrf.mxu0
        %v741 = vadd.f32 0.0, %v740
        %v742 = vpop.f32.mrf.mxu0
        %743 = vmatprep.mubr.bf16.mxu0 %v540
        %744 = vmatmul.mubr.bf16.gmra.mxu0 %v539
        %v745 = vpop.f32.mrf.mxu0
        %v746 = vadd.f32 0.0, %v745
        %v747 = vpop.f32.mrf.mxu0
        %v748 = vpop.f32.mrf.mxu0
        %v749 = vadd.f32 0.0, %v748
        %v750 = vpop.f32.mrf.mxu0
        %751 = vmatprep.mubr.bf16.mxu0 %v542
        %752 = vmatmul.mubr.bf16.gmra.mxu0 %v541
        %v753 = vpop.f32.mrf.mxu0
        %v754 = vadd.f32 0.0, %v753
        %v755 = vpop.f32.mrf.mxu0
        %v756 = vpop.f32.mrf.mxu0
        %v757 = vadd.f32 0.0, %v756
        %v758 = vpop.f32.mrf.mxu0
        %759 = vmatprep.mubr.bf16.mxu0 %v544
        %760 = vmatmul.mubr.bf16.gmra.mxu0 %v543
        %v761 = vpop.f32.mrf.mxu0
        %v762 = vadd.f32 0.0, %v761
        %v763 = vpop.f32.mrf.mxu0
        %v764 = vpop.f32.mrf.mxu0
        %v765 = vadd.f32 0.0, %v764
        %v766 = vpop.f32.mrf.mxu0
        %767 = vmatprep.mubr.bf16.mxu0 %v546
        %768 = vmatmul.mubr.bf16.gmra.mxu0 %v545
        %v769 = vpop.f32.mrf.mxu0
        %v770 = vadd.f32 0.0, %v769
        %v771 = vpop.f32.mrf.mxu0
        %v772 = vpop.f32.mrf.mxu0
        %v773 = vadd.f32 0.0, %v772
        %v774 = vpop.f32.mrf.mxu0
        %775 = vmatprep.mubr.bf16.mxu0 %v548
        %776 = vmatmul.mubr.bf16.gmra.mxu0 %v547
        %v777 = vpop.f32.mrf.mxu0
        %v778 = vadd.f32 0.0, %v777
        %v779 = vpop.f32.mrf.mxu0
        %v780 = vpop.f32.mrf.mxu0
        %v781 = vadd.f32 0.0, %v780
        %v782 = vpop.f32.mrf.mxu0
        %783 = vmatprep.mubr.bf16.mxu0 %v550
        %784 = vmatmul.mubr.bf16.gmra.mxu0 %v549
        %v785 = vpop.f32.mrf.mxu0
        %v786 = vadd.f32 0.0, %v785
        %v787 = vpop.f32.mrf.mxu0
        %v788 = vpop.f32.mrf.mxu0
        %v789 = vadd.f32 0.0, %v788
        %v790 = vpop.f32.mrf.mxu0
        %791 = vmatprep.mubr.bf16.mxu0 %v552
        %792 = vmatmul.mubr.bf16.gmra.mxu0 %v551
        %v793 = vpop.f32.mrf.mxu0
        %v794 = vadd.f32 0.0, %v793
        %v795 = vpop.f32.mrf.mxu0
        %v796 = vpop.f32.mrf.mxu0
        %v797 = vadd.f32 0.0, %v796
        %v798 = vpop.f32.mrf.mxu0
        %799 = vmatprep.mubr.bf16.mxu0 %v554
        %800 = vmatmul.mubr.bf16.gmra.mxu0 %v553
        %v801 = vpop.f32.mrf.mxu0
        %v802 = vadd.f32 0.0, %v801
        %v803 = vpop.f32.mrf.mxu0
        %v804 = vpop.f32.mrf.mxu0
        %v805 = vadd.f32 0.0, %v804
        %v806 = vpop.f32.mrf.mxu0
        %807 = vmatprep.mubr.bf16.mxu0 %v556
        %808 = vmatmul.mubr.bf16.gmra.mxu0 %v555
        %v809 = vpop.f32.mrf.mxu0
        %v810 = vadd.f32 0.0, %v809
        %v811 = vpop.f32.mrf.mxu0
        %v812 = vpop.f32.mrf.mxu0
        %v813 = vadd.f32 0.0, %v812
        %v814 = vpop.f32.mrf.mxu0
        %815 = vmatprep.mubr.bf16.mxu0 %v558
        %816 = vmatmul.mubr.bf16.gmra.mxu0 %v557
        %v817 = vpop.f32.mrf.mxu0
        %v818 = vadd.f32 0.0, %v817
        %v819 = vpop.f32.mrf.mxu0
        %v820 = vpop.f32.mrf.mxu0
        %v821 = vadd.f32 0.0, %v820
        %v822 = vpop.f32.mrf.mxu0
        %823 = vmatprep.mubr.bf16.mxu0 %v560
        %824 = vmatmul.mubr.bf16.gmra.mxu0 %v559
        %v825 = vpop.f32.mrf.mxu0
        %v826 = vadd.f32 0.0, %v825
        %v827 = vpop.f32.mrf.mxu0
        %v828 = vpop.f32.mrf.mxu0
        %v829 = vadd.f32 0.0, %v828
        %v830 = vpop.f32.mrf.mxu0
        %831 = vmatprep.mubr.bf16.mxu0 %v562
        %832 = vmatmul.mubr.bf16.gmra.mxu0 %v561
        %v833 = vpop.f32.mrf.mxu0
        %v834 = vadd.f32 0.0, %v833
        %v835 = vpop.f32.mrf.mxu0
        %v836 = vpop.f32.mrf.mxu0
        %v837 = vadd.f32 0.0, %v836
        %v838 = vpop.f32.mrf.mxu0
        %839 = vmatprep.mubr.bf16.mxu0 %v564
        %840 = vmatmul.mubr.bf16.gmra.mxu0 %v563
        %v841 = vpop.f32.mrf.mxu0
        %v842 = vadd.f32 0.0, %v841
        %v843 = vpop.f32.mrf.mxu0
        %v844 = vpop.f32.mrf.mxu0
        %v845 = vadd.f32 0.0, %v844
        %v846 = vpop.f32.mrf.mxu0
        %847 = vmatprep.mubr.bf16.mxu0 %v566
        %848 = vmatmul.mubr.bf16.gmra.mxu0 %v565
        %v849 = vpop.f32.mrf.mxu0
        %v850 = vadd.f32 0.0, %v849
        %v851 = vpop.f32.mrf.mxu0
        %v852 = vpop.f32.mrf.mxu0
        %v853 = vadd.f32 0.0, %v852
        %v854 = vpop.f32.mrf.mxu0
        %855 = vdwg.mxu0
        %v856 = vadd.f32 %v343, %v730
        %v857 = vadd.f32 %v344, %v733
        %v858 = vadd.f32 %v345, %v738
        %v859 = vadd.f32 %v346, %v741
        %v860 = vadd.f32 %v347, %v746
        %v861 = vadd.f32 %v348, %v749
        %v862 = vadd.f32 %v349, %v754
        %v863 = vadd.f32 %v350, %v757
        %v864 = vadd.f32 %v351, %v762
        %v865 = vadd.f32 %v352, %v765
        %v866 = vadd.f32 %v353, %v770
        %v867 = vadd.f32 %v354, %v773
        %v868 = vadd.f32 %v355, %v778
        %v869 = vadd.f32 %v356, %v781
        %v870 = vadd.f32 %v357, %v786
        %v871 = vadd.f32 %v358, %v789
        %v872 = vadd.f32 %v359, %v794
        %v873 = vadd.f32 %v360, %v797
        %v874 = vadd.f32 %v361, %v802
        %v875 = vadd.f32 %v362, %v805
        %v876 = vadd.f32 %v363, %v810
        %v877 = vadd.f32 %v364, %v813
        %v878 = vadd.f32 %v365, %v818
        %v879 = vadd.f32 %v366, %v821
        %v880 = vadd.f32 %v367, %v826
        %v881 = vadd.f32 %v368, %v829
        %v882 = vadd.f32 %v369, %v834
        %v883 = vadd.f32 %v370, %v837
        %v884 = vadd.f32 %v371, %v842
        %v885 = vadd.f32 %v372, %v845
        %v886 = vadd.f32 %v373, %v850
        %v887 = vadd.f32 %v374, %v853
        %vm888 = vcmask 523264
        %889 = vst.msk [vmem:[#allocation2] sm:$0xff] %vm888, %v856
        %890 = vst.msk [vmem:[#allocation2 + $0x8] sm:$0xff] %vm888, %v857
        %891 = vst.msk [vmem:[#allocation2 + $0x10] sm:$0xff] %vm888, %v858
        %892 = vst.msk [vmem:[#allocation2 + $0x18] sm:$0xff] %vm888, %v859
        %893 = vst.msk [vmem:[#allocation2 + $0x20] sm:$0xff] %vm888, %v860
        %894 = vst.msk [vmem:[#allocation2 + $0x28] sm:$0xff] %vm888, %v861
        %895 = vst.msk [vmem:[#allocation2 + $0x30] sm:$0xff] %vm888, %v862
        %896 = vst.msk [vmem:[#allocation2 + $0x38] sm:$0xff] %vm888, %v863
        %897 = vst.msk [vmem:[#allocation2 + $0x40] sm:$0xff] %vm888, %v864
        %898 = vst.msk [vmem:[#allocation2 + $0x48] sm:$0xff] %vm888, %v865
        %899 = vst.msk [vmem:[#allocation2 + $0x50] sm:$0xff] %vm888, %v866
        %900 = vst.msk [vmem:[#allocation2 + $0x58] sm:$0xff] %vm888, %v867
        %901 = vst.msk [vmem:[#allocation2 + $0x60] sm:$0xff] %vm888, %v868
        %902 = vst.msk [vmem:[#allocation2 + $0x68] sm:$0xff] %vm888, %v869
        %903 = vst.msk [vmem:[#allocation2 + $0x70] sm:$0xff] %vm888, %v870
        %904 = vst.msk [vmem:[#allocation2 + $0x78] sm:$0xff] %vm888, %v871
        %905 = vst.msk [vmem:[#allocation2 + $0x80] sm:$0xff] %vm888, %v872
        %906 = vst.msk [vmem:[#allocation2 + $0x88] sm:$0xff] %vm888, %v873
        %907 = vst.msk [vmem:[#allocation2 + $0x90] sm:$0xff] %vm888, %v874
        %908 = vst.msk [vmem:[#allocation2 + $0x98] sm:$0xff] %vm888, %v875
        %909 = vst.msk [vmem:[#allocation2 + $0xa0] sm:$0xff] %vm888, %v876
        %910 = vst.msk [vmem:[#allocation2 + $0xa8] sm:$0xff] %vm888, %v877
        %911 = vst.msk [vmem:[#allocation2 + $0xb0] sm:$0xff] %vm888, %v878
        %912 = vst.msk [vmem:[#allocation2 + $0xb8] sm:$0xff] %vm888, %v879
        %913 = vst.msk [vmem:[#allocation2 + $0xc0] sm:$0xff] %vm888, %v880
        %914 = vst.msk [vmem:[#allocation2 + $0xc8] sm:$0xff] %vm888, %v881
        %915 = vst.msk [vmem:[#allocation2 + $0xd0] sm:$0xff] %vm888, %v882
        %916 = vst.msk [vmem:[#allocation2 + $0xd8] sm:$0xff] %vm888, %v883
        %917 = vst.msk [vmem:[#allocation2 + $0xe0] sm:$0xff] %vm888, %v884
        %918 = vst.msk [vmem:[#allocation2 + $0xe8] sm:$0xff] %vm888, %v885
        %919 = vst.msk [vmem:[#allocation2 + $0xf0] sm:$0xff] %vm888, %v886
        %920 = vst.msk [vmem:[#allocation2 + $0xf8] sm:$0xff] %vm888, %v887
        // Predicated region
        $region33: #{conv2d.1} parent=27 // pred_check
          %p921 = pneg %p306
        $region34: #{conv2d.1} parent=27 // pred_check_branch
          %923 = sbr.rel (%p921) target = $region36
        $region35: #{conv2d.1} parent=27 // pred_region
          %v924 = vld [vmem:[#allocation2] sm:$0xff]
          %v925 = vld [vmem:[#allocation2 + $0x8] sm:$0xff]
          %v926 = vld [vmem:[#allocation2 + $0x10] sm:$0xff]
          %v927 = vld [vmem:[#allocation2 + $0x18] sm:$0xff]
          %v928 = vld [vmem:[#allocation2 + $0x20] sm:$0xff]
          %v929 = vld [vmem:[#allocation2 + $0x28] sm:$0xff]
          %v930 = vld [vmem:[#allocation2 + $0x30] sm:$0xff]
          %v931 = vld [vmem:[#allocation2 + $0x38] sm:$0xff]
          %v932 = vld [vmem:[#allocation2 + $0x40] sm:$0xff]
          %v933 = vld [vmem:[#allocation2 + $0x48] sm:$0xff]
          %v934 = vld [vmem:[#allocation2 + $0x50] sm:$0xff]
          %v935 = vld [vmem:[#allocation2 + $0x58] sm:$0xff]
          %v936 = vld [vmem:[#allocation2 + $0x60] sm:$0xff]
          %v937 = vld [vmem:[#allocation2 + $0x68] sm:$0xff]
          %v938 = vld [vmem:[#allocation2 + $0x70] sm:$0xff]
          %v939 = vld [vmem:[#allocation2 + $0x78] sm:$0xff]
          %v940 = vld [vmem:[#allocation2 + $0x80] sm:$0xff]
          %v941 = vld [vmem:[#allocation2 + $0x88] sm:$0xff]
          %v942 = vld [vmem:[#allocation2 + $0x90] sm:$0xff]
          %v943 = vld [vmem:[#allocation2 + $0x98] sm:$0xff]
          %v944 = vld [vmem:[#allocation2 + $0xa0] sm:$0xff]
          %v945 = vld [vmem:[#allocation2 + $0xa8] sm:$0xff]
          %v946 = vld [vmem:[#allocation2 + $0xb0] sm:$0xff]
          %v947 = vld [vmem:[#allocation2 + $0xb8] sm:$0xff]
          %v948 = vld [vmem:[#allocation2 + $0xc0] sm:$0xff]
          %v949 = vld [vmem:[#allocation2 + $0xc8] sm:$0xff]
          %v950 = vld [vmem:[#allocation2 + $0xd0] sm:$0xff]
          %v951 = vld [vmem:[#allocation2 + $0xd8] sm:$0xff]
          %v952 = vld [vmem:[#allocation2 + $0xe0] sm:$0xff]
          %v953 = vld [vmem:[#allocation2 + $0xe8] sm:$0xff]
          %v954 = vld [vmem:[#allocation2 + $0xf0] sm:$0xff]
          %v955 = vld [vmem:[#allocation2 + $0xf8] sm:$0xff]
          %956 = vst.msk [vmem:[%s254] sm:$0xff] %vm888, %v924
          %957 = vst.msk [vmem:[%s254 + $0x8] sm:$0xff] %vm888, %v925
          %958 = vst.msk [vmem:[%s254 + $0x10] sm:$0xff] %vm888, %v926
          %959 = vst.msk [vmem:[%s254 + $0x18] sm:$0xff] %vm888, %v927
          %960 = vst.msk [vmem:[%s254 + $0x20] sm:$0xff] %vm888, %v928
          %961 = vst.msk [vmem:[%s254 + $0x28] sm:$0xff] %vm888, %v929
          %962 = vst.msk [vmem:[%s254 + $0x30] sm:$0xff] %vm888, %v930
          %963 = vst.msk [vmem:[%s254 + $0x38] sm:$0xff] %vm888, %v931
          %964 = vst.msk [vmem:[%s254 + $0x40] sm:$0xff] %vm888, %v932
          %965 = vst.msk [vmem:[%s254 + $0x48] sm:$0xff] %vm888, %v933
          %966 = vst.msk [vmem:[%s254 + $0x50] sm:$0xff] %vm888, %v934
          %967 = vst.msk [vmem:[%s254 + $0x58] sm:$0xff] %vm888, %v935
          %968 = vst.msk [vmem:[%s254 + $0x60] sm:$0xff] %vm888, %v936
          %969 = vst.msk [vmem:[%s254 + $0x68] sm:$0xff] %vm888, %v937
          %970 = vst.msk [vmem:[%s254 + $0x70] sm:$0xff] %vm888, %v938
          %971 = vst.msk [vmem:[%s254 + $0x78] sm:$0xff] %vm888, %v939
          %972 = vst.msk [vmem:[%s254 + $0x80] sm:$0xff] %vm888, %v940
          %973 = vst.msk [vmem:[%s254 + $0x88] sm:$0xff] %vm888, %v941
          %974 = vst.msk [vmem:[%s254 + $0x90] sm:$0xff] %vm888, %v942
          %975 = vst.msk [vmem:[%s254 + $0x98] sm:$0xff] %vm888, %v943
          %976 = vst.msk [vmem:[%s254 + $0xa0] sm:$0xff] %vm888, %v944
          %977 = vst.msk [vmem:[%s254 + $0xa8] sm:$0xff] %vm888, %v945
          %978 = vst.msk [vmem:[%s254 + $0xb0] sm:$0xff] %vm888, %v946
          %979 = vst.msk [vmem:[%s254 + $0xb8] sm:$0xff] %vm888, %v947
          %980 = vst.msk [vmem:[%s254 + $0xc0] sm:$0xff] %vm888, %v948
          %981 = vst.msk [vmem:[%s254 + $0xc8] sm:$0xff] %vm888, %v949
          %982 = vst.msk [vmem:[%s254 + $0xd0] sm:$0xff] %vm888, %v950
          %983 = vst.msk [vmem:[%s254 + $0xd8] sm:$0xff] %vm888, %v951
          %984 = vst.msk [vmem:[%s254 + $0xe0] sm:$0xff] %vm888, %v952
          %985 = vst.msk [vmem:[%s254 + $0xe8] sm:$0xff] %vm888, %v953
          %986 = vst.msk [vmem:[%s254 + $0xf0] sm:$0xff] %vm888, %v954
          %987 = vst.msk [vmem:[%s254 + $0xf8] sm:$0xff] %vm888, %v955
          %v988 = vsel %vm888, %v924, 0.0
          %v989 = vsel %vm888, %v925, 0.0
          %v990 = vadd.f32 %v988, %v989
          %v991 = vsel %vm888, %v926, 0.0
          %v992 = vadd.f32 %v990, %v991
          %v993 = vsel %vm888, %v927, 0.0
          %v994 = vadd.f32 %v992, %v993
          %v995 = vsel %vm888, %v928, 0.0
          %v996 = vadd.f32 %v994, %v995
          %v997 = vsel %vm888, %v929, 0.0
          %v998 = vadd.f32 %v996, %v997
          %v999 = vsel %vm888, %v930, 0.0
          %v1000 = vadd.f32 %v998, %v999
          %v1001 = vsel %vm888, %v931, 0.0
          %v1002 = vadd.f32 %v1000, %v1001
          %v1003 = vsel %vm888, %v932, 0.0
          %v1004 = vadd.f32 %v1002, %v1003
          %v1005 = vsel %vm888, %v933, 0.0
          %v1006 = vadd.f32 %v1004, %v1005
          %v1007 = vsel %vm888, %v934, 0.0
          %v1008 = vadd.f32 %v1006, %v1007
          %v1009 = vsel %vm888, %v935, 0.0
          %v1010 = vadd.f32 %v1008, %v1009
          %v1011 = vsel %vm888, %v936, 0.0
          %v1012 = vadd.f32 %v1010, %v1011
          %v1013 = vsel %vm888, %v937, 0.0
          %v1014 = vadd.f32 %v1012, %v1013
          %v1015 = vsel %vm888, %v938, 0.0
          %v1016 = vadd.f32 %v1014, %v1015
          %v1017 = vsel %vm888, %v939, 0.0
          %v1018 = vadd.f32 %v1016, %v1017
          %v1019 = vsel %vm888, %v940, 0.0
          %v1020 = vadd.f32 %v1018, %v1019
          %v1021 = vsel %vm888, %v941, 0.0
          %v1022 = vadd.f32 %v1020, %v1021
          %v1023 = vsel %vm888, %v942, 0.0
          %v1024 = vadd.f32 %v1022, %v1023
          %v1025 = vsel %vm888, %v943, 0.0
          %v1026 = vadd.f32 %v1024, %v1025
          %v1027 = vsel %vm888, %v944, 0.0
          %v1028 = vadd.f32 %v1026, %v1027
          %v1029 = vsel %vm888, %v945, 0.0
          %v1030 = vadd.f32 %v1028, %v1029
          %v1031 = vsel %vm888, %v946, 0.0
          %v1032 = vadd.f32 %v1030, %v1031
          %v1033 = vsel %vm888, %v947, 0.0
          %v1034 = vadd.f32 %v1032, %v1033
          %v1035 = vsel %vm888, %v948, 0.0
          %v1036 = vadd.f32 %v1034, %v1035
          %v1037 = vsel %vm888, %v949, 0.0
          %v1038 = vadd.f32 %v1036, %v1037
          %v1039 = vsel %vm888, %v950, 0.0
          %v1040 = vadd.f32 %v1038, %v1039
          %v1041 = vsel %vm888, %v951, 0.0
          %v1042 = vadd.f32 %v1040, %v1041
          %v1043 = vsel %vm888, %v952, 0.0
          %v1044 = vadd.f32 %v1042, %v1043
          %v1045 = vsel %vm888, %v953, 0.0
          %v1046 = vadd.f32 %v1044, %v1045
          %v1047 = vsel %vm888, %v954, 0.0
          %v1048 = vadd.f32 %v1046, %v1047
          %v1049 = vsel %vm888, %v955, 0.0
          %v1050 = vadd.f32 %v1048, %v1049
          %v1051 = vrot.slane %v1050, 4
          %v1052 = vadd.f32 %v1050, %v1051
          %v1053 = vrot.slane %v1052, 2
          %v1054 = vadd.f32 %v1052, %v1053
          %v1055 = vrot.slane %v1054, 1
          %v1056 = vadd.f32 %v1054, %v1055
          %vm1057 = vcmask 516096
          %1058 = vst.msk [vmem:[%s298] sm:$0x1] %vm1057, %v1056
          %v1059 = vmul.f32 %v924, %v924
          %v1060 = vmul.f32 %v925, %v925
          %v1061 = vmul.f32 %v926, %v926
          %v1062 = vmul.f32 %v927, %v927
          %v1063 = vmul.f32 %v928, %v928
          %v1064 = vmul.f32 %v929, %v929
          %v1065 = vmul.f32 %v930, %v930
          %v1066 = vmul.f32 %v931, %v931
          %v1067 = vmul.f32 %v932, %v932
          %v1068 = vmul.f32 %v933, %v933
          %v1069 = vmul.f32 %v934, %v934
          %v1070 = vmul.f32 %v935, %v935
          %v1071 = vmul.f32 %v936, %v936
          %v1072 = vmul.f32 %v937, %v937
          %v1073 = vmul.f32 %v938, %v938
          %v1074 = vmul.f32 %v939, %v939
          %v1075 = vmul.f32 %v940, %v940
          %v1076 = vmul.f32 %v941, %v941
          %v1077 = vmul.f32 %v942, %v942
          %v1078 = vmul.f32 %v943, %v943
          %v1079 = vmul.f32 %v944, %v944
          %v1080 = vmul.f32 %v945, %v945
          %v1081 = vmul.f32 %v946, %v946
          %v1082 = vmul.f32 %v947, %v947
          %v1083 = vmul.f32 %v948, %v948
          %v1084 = vmul.f32 %v949, %v949
          %v1085 = vmul.f32 %v950, %v950
          %v1086 = vmul.f32 %v951, %v951
          %v1087 = vmul.f32 %v952, %v952
          %v1088 = vmul.f32 %v953, %v953
          %v1089 = vmul.f32 %v954, %v954
          %v1090 = vmul.f32 %v955, %v955
          %v1091 = vsel %vm888, %v1059, 0.0
          %v1092 = vsel %vm888, %v1060, 0.0
          %v1093 = vadd.f32 %v1091, %v1092
          %v1094 = vsel %vm888, %v1061, 0.0
          %v1095 = vadd.f32 %v1093, %v1094
          %v1096 = vsel %vm888, %v1062, 0.0
          %v1097 = vadd.f32 %v1095, %v1096
          %v1098 = vsel %vm888, %v1063, 0.0
          %v1099 = vadd.f32 %v1097, %v1098
          %v1100 = vsel %vm888, %v1064, 0.0
          %v1101 = vadd.f32 %v1099, %v1100
          %v1102 = vsel %vm888, %v1065, 0.0
          %v1103 = vadd.f32 %v1101, %v1102
          %v1104 = vsel %vm888, %v1066, 0.0
          %v1105 = vadd.f32 %v1103, %v1104
          %v1106 = vsel %vm888, %v1067, 0.0
          %v1107 = vadd.f32 %v1105, %v1106
          %v1108 = vsel %vm888, %v1068, 0.0
          %v1109 = vadd.f32 %v1107, %v1108
          %v1110 = vsel %vm888, %v1069, 0.0
          %v1111 = vadd.f32 %v1109, %v1110
          %v1112 = vsel %vm888, %v1070, 0.0
          %v1113 = vadd.f32 %v1111, %v1112
          %v1114 = vsel %vm888, %v1071, 0.0
          %v1115 = vadd.f32 %v1113, %v1114
          %v1116 = vsel %vm888, %v1072, 0.0
          %v1117 = vadd.f32 %v1115, %v1116
          %v1118 = vsel %vm888, %v1073, 0.0
          %v1119 = vadd.f32 %v1117, %v1118
          %v1120 = vsel %vm888, %v1074, 0.0
          %v1121 = vadd.f32 %v1119, %v1120
          %v1122 = vsel %vm888, %v1075, 0.0
          %v1123 = vadd.f32 %v1121, %v1122
          %v1124 = vsel %vm888, %v1076, 0.0
          %v1125 = vadd.f32 %v1123, %v1124
          %v1126 = vsel %vm888, %v1077, 0.0
          %v1127 = vadd.f32 %v1125, %v1126
          %v1128 = vsel %vm888, %v1078, 0.0
          %v1129 = vadd.f32 %v1127, %v1128
          %v1130 = vsel %vm888, %v1079, 0.0
          %v1131 = vadd.f32 %v1129, %v1130
          %v1132 = vsel %vm888, %v1080, 0.0
          %v1133 = vadd.f32 %v1131, %v1132
          %v1134 = vsel %vm888, %v1081, 0.0
          %v1135 = vadd.f32 %v1133, %v1134
          %v1136 = vsel %vm888, %v1082, 0.0
          %v1137 = vadd.f32 %v1135, %v1136
          %v1138 = vsel %vm888, %v1083, 0.0
          %v1139 = vadd.f32 %v1137, %v1138
          %v1140 = vsel %vm888, %v1084, 0.0
          %v1141 = vadd.f32 %v1139, %v1140
          %v1142 = vsel %vm888, %v1085, 0.0
          %v1143 = vadd.f32 %v1141, %v1142
          %v1144 = vsel %vm888, %v1086, 0.0
          %v1145 = vadd.f32 %v1143, %v1144
          %v1146 = vsel %vm888, %v1087, 0.0
          %v1147 = vadd.f32 %v1145, %v1146
          %v1148 = vsel %vm888, %v1088, 0.0
          %v1149 = vadd.f32 %v1147, %v1148
          %v1150 = vsel %vm888, %v1089, 0.0
          %v1151 = vadd.f32 %v1149, %v1150
          %v1152 = vsel %vm888, %v1090, 0.0
          %v1153 = vadd.f32 %v1151, %v1152
          %v1154 = vrot.slane %v1153, 4
          %v1155 = vadd.f32 %v1153, %v1154
          %v1156 = vrot.slane %v1155, 2
          %v1157 = vadd.f32 %v1155, %v1156
          %v1158 = vrot.slane %v1157, 1
          %v1159 = vadd.f32 %v1157, %v1158
          %1160 = vst.msk [vmem:[%s304] sm:$0x1] %vm1057, %v1159
        $region36: #{conv2d.1} parent=27 // pred_fallthru
          _
        %s1161 = sand.u32 %s104, 1
        %s1162 = scalar_lea.sflag [#allocation4], %s1161
        %s1163 = sand.u32 %s104, 1
        %s1164 = smul.addr %s1163, 256
        %s1165 = scalar_lea.vmem [#allocation3], %s1164
        %p1166 = scmp.lt.s32.totalorder %s24, 1
        %s1167 = scalar_select %p1166, %s24, 1
        %p1168 = scmp.lt.s32.totalorder %s25, 0
        %s1169 = scalar_select %p1168, %s25, 0
        %s1170 = sadd.s32 %s1169, %s1167
        %s1171 = scalar_lea.vmem %s3, %s1170
        %p1172 = scmp.lt.s32.totalorder %s24, 1
        %s1173 = scalar_select %p1172, %s24, 1
        %p1174 = scmp.lt.s32.totalorder %s25, 0
        %s1175 = scalar_select %p1174, %s25, 0
        %s1176 = sadd.s32 %s1175, %s1173
        %s1177 = scalar_lea.vmem %s4, %s1176
        // Predicated region
        $region37: #{conv2d.1} parent=27 // pred_check
          %p1178 = pneg %p114
        $region38: #{conv2d.1} parent=27 // pred_check_branch
          %1180 = sbr.rel (%p1178) target = $region40
        $region39: #{conv2d.1} parent=27 // pred_region
          %s1181 = smul.u32 32, %s24
          %s1183 = ssub.s32 4096, 4096
          %1184 = vsyncadd %s1162, %s1183
          %s1185 = sadd.s32 %s25, %s1181
          %s1186 = smul.addr %s1185, 128
          %s1187 = scalar_lea.hbm %s2, %s1186
          %s1188 = sshll.u32 %s1165, 4
          %s1189 = int_to_ptr.vmem [resolvable:$true] %s1188
          %1194 = dma.vmem_to_hbm [thread:$0]  %s1189, 4096, %s1187, %s1162, 128, 128, 8
        $region40: #{conv2d.1} parent=27 // pred_fallthru
          _
        // Predicated region
        $region41: #{conv2d.1} parent=27 // pred_check
          %p1195 = pneg %p142
        $region42: #{conv2d.1} parent=27 // pred_check_branch
          %1197 = sbr.rel (%p1195) target = $region44
        $region43: #{conv2d.1} parent=27 // pred_region
          _
        $region44: #{conv2d.1} parent=27 // pred_fallthru
          _
        // Predicated region
        $region45: #{conv2d.1} parent=27 // pred_check
          %p1198 = pneg %p170
        $region46: #{conv2d.1} parent=27 // pred_check_branch
          %1200 = sbr.rel (%p1198) target = $region48
        $region47: #{conv2d.1} parent=27 // pred_region
          _
        $region48: #{conv2d.1} parent=27 // pred_fallthru
          _
      $region28: #{conv2d.1} parent=5 // pred_fallthru
        _
      %p1201 = scmp.le.s32.totalorder 2, %s14
      // Predicated region
      $region49: #{conv2d.1} parent=5 // pred_check
        %p1202 = pneg %p1201
      $region50: #{conv2d.1} parent=5 // pred_check_branch
        %1204 = sbr.rel (%p1202) target = $region52
      $region51: #{conv2d.1} parent=5 // pred_region
        %s1205 = ssub.s32 %s14, 2
        // Predicated region
        $region53: #{conv2d.1} parent=51 // pred_check
          %p1206 = pneg %p120
        $region54: #{conv2d.1} parent=51 // pred_check_branch
          %1208 = sbr.rel (%p1206) target = $region56
        $region55: #{conv2d.1} parent=51 // pred_region
          %s1209 = sand.u32 %s105, 1
          %s1210 = scalar_lea.sflag [#allocation4], %s1209
          %s1211 = sand.u32 %s105, 1
          %s1212 = smul.addr %s1211, 256
          %s1213 = scalar_lea.vmem [#allocation3], %s1212
          %1214 = dma.done %s1210, 4096
        $region56: #{conv2d.1} parent=51 // pred_fallthru
          _
        // Predicated region
        $region57: #{conv2d.1} parent=51 // pred_check
          %p1215 = pneg %p148
        $region58: #{conv2d.1} parent=51 // pred_check_branch
          %1217 = sbr.rel (%p1215) target = $region60
        $region59: #{conv2d.1} parent=51 // pred_region
          %p1218 = scmp.lt.s32.totalorder %s27, 1
          %s1219 = scalar_select %p1218, %s27, 1
          %p1220 = scmp.lt.s32.totalorder %s28, 0
          %s1221 = scalar_select %p1220, %s28, 0
          %s1222 = sadd.s32 %s1221, %s1219
          %s1223 = scalar_lea.vmem %s3, %s1222
        $region60: #{conv2d.1} parent=51 // pred_fallthru
          _
        // Predicated region
        $region61: #{conv2d.1} parent=51 // pred_check
          %p1224 = pneg %p176
        $region62: #{conv2d.1} parent=51 // pred_check_branch
          %1226 = sbr.rel (%p1224) target = $region64
        $region63: #{conv2d.1} parent=51 // pred_region
          %p1227 = scmp.lt.s32.totalorder %s27, 1
          %s1228 = scalar_select %p1227, %s27, 1
          %p1229 = scmp.lt.s32.totalorder %s28, 0
          %s1230 = scalar_select %p1229, %s28, 0
          %s1231 = sadd.s32 %s1230, %s1228
          %s1232 = scalar_lea.vmem %s4, %s1231
        $region64: #{conv2d.1} parent=51 // pred_fallthru
          _
      $region52: #{conv2d.1} parent=5 // pred_fallthru
        _
    $region6: #{conv2d.1} parent=1 // loop_footer
      %s18 = sadd.s32 1, %s14
    $region7: #{conv2d.1} parent=1 // loop_footer_branch
      %13 = sbr.rel target = $region3
    $region8: #{conv2d.1} parent=1 // loop_exit
      _
    %1233 = vsyncpa [#allocation4], 1
    %s1234 = scalar_lea.sflag [#allocation4], 1
    %1235 = vsyncpa %s1234, 1

</llo_original>
